<compile_context>
chip_gen: v5e
topology: v5e:2x2
jax: 0.10.0
libtpu: 0.0.40
codegen_flags: <defaults>
</compile_context>

<pallas_src>
import jax
import jax.numpy as jnp
from jax import lax
from jax.experimental import pallas as pl
from jax.experimental.pallas import tpu as pltpu

# ---- small, module-consistent shapes --------------------------------------
B = 2                   # batch
H = W = 16              # input spatial
IN_FLAT = 3 * H * W     # flattened image (768)
FEAT = 256              # stand-in for resnet50's 2048-d feature
MID = 128               # stand-in for Conv(2048, 1280) output channels
RED = 16                # DEA squeeze-excite reduction
CLASSES = 5             # nn.Linear(1280, 5)
MPAD = 8                # f32 sublane tile (rows: rgb0..B-1, th0..B-1, pad)
NPAD = 128              # lane-dense classifier output width

# column offsets inside the coalesced small-f32 pack (all 128-lane aligned)
_SC0, _SC1 = 0, FEAT                        # per-row int8 dequant scales
_BB0, _BB1 = FEAT, 2 * FEAT                 # per-row backbone bias
_BN0, _BN1 = 2 * FEAT, 2 * FEAT + MID       # folded-BN shift (broadcast rows)
_LB0, _LB1 = 2 * FEAT + MID, 2 * FEAT + MID + NPAD   # classifier bias
SF_W = _LB1                                 # 768


def _vmem():
    return pl.BlockSpec(memory_space=pltpu.MemorySpace.VMEM)


# ---------------------------------------------------------------------------
# Single fused kernel: backbones -> DEA fusion -> Conv/BN/SiLU -> Linear
# ---------------------------------------------------------------------------
def fused_kernel(x_ref, wq_ref, sf_ref, fc1_ref, fc2_ref, convw_ref, linw_ref,
                 out_ref):
    # ---- backbone stand-in ------------------------------------------------
    # x_ref: (MPAD, IN_FLAT) bf16; rows 0..B-1 rgb, B..2B-1 thermal, rest 0.
    # wq_ref: (2*IN_FLAT, FEAT) int8, [w_rgb ; w_th] stacked along K.
    x = x_ref[...]                                                # bf16
    w_rgb = wq_ref[0:IN_FLAT, :].astype(jnp.float32).astype(jnp.bfloat16)
    w_th = wq_ref[IN_FLAT:2 * IN_FLAT, :].astype(jnp.float32).astype(jnp.bfloat16)

    f_rgb = jnp.dot(x, w_rgb, preferred_element_type=jnp.float32)  # (MPAD, FEAT)
    f_th = jnp.dot(x, w_th, preferred_element_type=jnp.float32)    # (MPAD, FEAT)

    scale_rows = sf_ref[:, _SC0:_SC1]        # per-row dequant scale (pads = 0)
    bias_rows = sf_ref[:, _BB0:_BB1]         # per-row backbone bias (pads = 0)
    bn_shift = sf_ref[:, _BN0:_BN1]          # folded-BN shift (all rows)
    lin_b = sf_ref[:, _LB0:_LB1]             # classifier bias (all rows)

    row = lax.broadcasted_iota(jnp.int32, (MPAD, FEAT), 0)
    is_rgb = row < B
    feats = jnp.maximum(
        jnp.where(is_rgb, f_rgb, f_th) * scale_rows + bias_rows, 0.0)  # (MPAD, FEAT)

    # ---- DEA: cross-modal channel attention (SE matmuls merged) -----------
    # fc1_ref = [fc1_vi | fc1_ir] (N-concat); fc2_ref block-diagonal so each
    # modality's rows only produce their own pre-gate in their column block.
    h = jnp.maximum(
        jnp.dot(feats.astype(jnp.bfloat16), fc1_ref[...],
                preferred_element_type=jnp.float32), 0.0)         # (MPAD, 2*RED)
    z = jnp.dot(h.astype(jnp.bfloat16), fc2_ref[...],
                preferred_element_type=jnp.float32)               # (MPAD, 2*FEAT)
    gates_own = jax.nn.sigmoid(
        jnp.where(is_rgb, z[:, 0:FEAT], z[:, FEAT:2 * FEAT]))     # g_vi / g_ir per row

    # Cross-modal row swap (rgb<->thermal) as an exact 8x8 permutation matmul
    # built in-kernel (full-tile, no sub-8-row slices / masked stores).
    ri = lax.broadcasted_iota(jnp.int32, (MPAD, MPAD), 0)
    ci = lax.broadcasted_iota(jnp.int32, (MPAD, MPAD), 1)
    partner = jnp.where(ri < B, ri + B, ri - B)       # pad rows: harmless garbage
    perm = (ci == partner).astype(jnp.float32)
    feats_swap = jnp.dot(perm, feats, preferred_element_type=jnp.float32)
    gates_swap = jnp.dot(perm, gates_own, preferred_element_type=jnp.float32)

    # fused = vi * g_ir + ir * g_vi   (valid on rows 0..2B-1; pads sliced away)
    fused = feats * gates_swap + feats_swap * gates_own           # (MPAD, FEAT)

    # ---- Conv(FEAT, MID, 1, 1): 1x1 conv, BN folded, + SiLU ---------------
    y = jnp.dot(fused.astype(jnp.bfloat16), convw_ref[...],
                preferred_element_type=jnp.float32) + bn_shift    # (MPAD, MID)
    y = y * jax.nn.sigmoid(y)                                     # SiLU

    # AdaptiveAvgPool2d(1) over 1x1 spatial == identity; flatten(1) == identity;
    # Dropout (eval) == identity.  Lane-dense (N=128), full-tile (M=8) store.
    out_ref[...] = (jnp.dot(y.astype(jnp.bfloat16), linw_ref[...],
                            preferred_element_type=jnp.float32) + lin_b)


def run_fused(x_pack, p):
    flops = 2 * MPAD * (2 * IN_FLAT * FEAT + FEAT * 2 * RED + 2 * RED * 2 * FEAT
                        + 2 * MPAD * FEAT + FEAT * MID + MID * NPAD)
    transcendentals = MPAD * (FEAT + MID)
    bytes_accessed = (x_pack.size * 2 + p["wq_bb"].size + p["sf"].size * 4
                      + (p["fc1_cat"].size + p["fc2_bd"].size
                         + p["conv_w"].size + p["lin_w"].size) * 2
                      + MPAD * NPAD * 4)
    return pl.pallas_call(
        fused_kernel,
        out_shape=jax.ShapeDtypeStruct((MPAD, NPAD), jnp.float32),
        in_specs=[_vmem()] * 7,
        out_specs=_vmem(),
        compiler_params=pltpu.CompilerParams(vmem_limit_bytes=64 * 1024 * 1024),
        cost_estimate=pl.CostEstimate(flops=flops,
                                      transcendentals=transcendentals,
                                      bytes_accessed=bytes_accessed),
    )(x_pack, p["wq_bb"], p["sf"], p["fc1_cat"], p["fc2_bd"],
      p["conv_w"], p["lin_w"])


# ---------------------------------------------------------------------------
# Deterministic parameter construction (kernel-friendly layout)
# ---------------------------------------------------------------------------
def make_params(key):
    ks = jax.random.split(key, 16)
    s = lambda fan_in: 1.0 / jnp.sqrt(jnp.float32(fan_in))

    # logical (module-level) parameters
    bb_w_rgb = jax.random.normal(ks[0], (IN_FLAT, FEAT), jnp.float32) * s(IN_FLAT)
    bb_b_rgb = jax.random.normal(ks[1], (1, FEAT), jnp.float32) * 0.01
    bb_w_th = jax.random.normal(ks[2], (IN_FLAT, FEAT), jnp.float32) * s(IN_FLAT)
    bb_b_th = jax.random.normal(ks[3], (1, FEAT), jnp.float32) * 0.01

    fc1_vi = jax.random.normal(ks[4], (FEAT, RED), jnp.float32) * s(FEAT)
    fc2_vi = jax.random.normal(ks[5], (RED, FEAT), jnp.float32) * s(RED)
    fc1_ir = jax.random.normal(ks[6], (FEAT, RED), jnp.float32) * s(FEAT)
    fc2_ir = jax.random.normal(ks[7], (RED, FEAT), jnp.float32) * s(RED)

    conv_w = jax.random.normal(ks[8], (FEAT, MID), jnp.float32) * s(FEAT)
    bn_gamma = 1.0 + 0.1 * jax.random.normal(ks[9], (1, MID), jnp.float32)
    bn_beta = 0.1 * jax.random.normal(ks[10], (1, MID), jnp.float32)
    bn_mean = 0.1 * jax.random.normal(ks[11], (1, MID), jnp.float32)
    bn_var = jnp.abs(jax.random.normal(ks[12], (1, MID), jnp.float32)) + 0.5
    bn_eps = 1e-5

    lin_w = jax.random.normal(ks[13], (MID, CLASSES), jnp.float32) * s(MID)
    lin_b = jax.random.normal(ks[14], (1, CLASSES), jnp.float32) * 0.01

    # ---- int8 backbone weight (per-output-column symmetric scale) ---------
    def quantize(w):
        amax = jnp.maximum(jnp.max(jnp.abs(w), axis=0, keepdims=True), 1e-8)
        scale = amax / 127.0
        q = jnp.clip(jnp.round(w / scale), -127, 127).astype(jnp.int8)
        return q, scale

    q_rgb, sc_rgb = quantize(bb_w_rgb)
    q_th, sc_th = quantize(bb_w_th)
    wq_bb = jnp.concatenate([q_rgb, q_th], axis=0)          # (2*IN_FLAT, FEAT) int8

    # ---- coalesced small-f32 pack: scales | backbone bias | BN shift | lin_b
    zrows = MPAD - 2 * B
    scale_rows = jnp.concatenate(
        [jnp.broadcast_to(sc_rgb, (B, FEAT)),
         jnp.broadcast_to(sc_th, (B, FEAT)),
         jnp.zeros((zrows, FEAT), jnp.float32)], axis=0)
    bias_rows = jnp.concatenate(
        [jnp.broadcast_to(bb_b_rgb, (B, FEAT)),
         jnp.broadcast_to(bb_b_th, (B, FEAT)),
         jnp.zeros((zrows, FEAT), jnp.float32)], axis=0)

    bn_scale = bn_gamma / jnp.sqrt(bn_var + bn_eps)          # proper BN fold
    bn_shift = bn_beta - bn_mean * bn_scale                  # (1, MID)
    bn_shift_rows = jnp.broadcast_to(bn_shift, (MPAD, MID))

    lin_b_pad = jnp.zeros((1, NPAD), jnp.float32).at[:, :CLASSES].set(lin_b)
    lin_b_rows = jnp.broadcast_to(lin_b_pad, (MPAD, NPAD))

    sf = jnp.concatenate([scale_rows, bias_rows, bn_shift_rows, lin_b_rows],
                         axis=1)                              # (MPAD, SF_W) f32
    assert sf.shape == (MPAD, SF_W)

    # ---- bf16 matmul weights ----------------------------------------------
    fc1_cat = jnp.concatenate([fc1_vi, fc1_ir], axis=1).astype(jnp.bfloat16)
    fc2_bd = jnp.zeros((2 * RED, 2 * FEAT), jnp.float32)
    fc2_bd = fc2_bd.at[0:RED, 0:FEAT].set(fc2_vi)
    fc2_bd = fc2_bd.at[RED:2 * RED, FEAT:2 * FEAT].set(fc2_ir)
    fc2_bd = fc2_bd.astype(jnp.bfloat16)

    conv_w_folded = (conv_w * bn_scale).astype(jnp.bfloat16)

    lin_w_pad = jnp.zeros((MID, NPAD), jnp.float32).at[:, :CLASSES].set(lin_w)
    lin_w_pad = lin_w_pad.astype(jnp.bfloat16)

    return {
        "wq_bb": wq_bb,
        "sf": sf,
        "fc1_cat": fc1_cat,
        "fc2_bd": fc2_bd,
        "conv_w": conv_w_folded,
        "lin_w": lin_w_pad,
    }


def resnet_deca_depa_forward(rgb_image, thermal_image, params):
    # Stack both modalities along the batch axis, pad to a full 8-sublane tile,
    # and cast to bf16 in the wrapper (no zero-padded block-diag LHS in HBM).
    x_rgb = rgb_image.reshape(B, IN_FLAT)
    x_th = thermal_image.reshape(B, IN_FLAT)
    x_pack = jnp.concatenate(
        [x_rgb, x_th, jnp.zeros((MPAD - 2 * B, IN_FLAT), jnp.float32)],
        axis=0).astype(jnp.bfloat16)                    # (MPAD, IN_FLAT) bf16

    out_pad = run_fused(x_pack, params)                 # (MPAD, NPAD)
    return out_pad[:B, :CLASSES]                        # (B, CLASSES)


if __name__ == "__main__":
    key = jax.random.PRNGKey(0)
    k_rgb, k_th, k_par = jax.random.split(key, 3)
    rgb_image = jax.random.normal(k_rgb, (B, 3, H, W), jnp.float32)      # NCHW
    thermal_image = jax.random.normal(k_th, (B, 3, H, W), jnp.float32)   # NCHW
    params = make_params(k_par)

    logits = resnet_deca_depa_forward(rgb_image, thermal_image, params)
    logits = jax.block_until_ready(logits)

    assert logits.shape == (B, CLASSES), logits.shape
    assert jnp.all(jnp.isfinite(logits))
    print("KERNEL_OK")
</pallas_src>

<mosaic_0001>
module attributes {stable_mosaic.version = 11 : i64} {
  func.func @fused_kernel(%arg0: memref<8x768xbf16, #tpu.memory_space<vmem>>, %arg1: memref<1536x256xi8, #tpu.memory_space<vmem>>, %arg2: memref<8x768xf32, #tpu.memory_space<vmem>>, %arg3: memref<256x32xbf16, #tpu.memory_space<vmem>>, %arg4: memref<32x512xbf16, #tpu.memory_space<vmem>>, %arg5: memref<256x128xbf16, #tpu.memory_space<vmem>>, %arg6: memref<128x128xbf16, #tpu.memory_space<vmem>>, %arg7: memref<8x128xf32, #tpu.memory_space<vmem>>) attributes {dimension_semantics = [], scalar_prefetch = 0 : i64, scratch_operands = 0 : i64, tpu.core_type = #tpu.core_type<tc>} {
    %c0 = arith.constant 0 : index
    %c0_0 = arith.constant 0 : index
    %0 = vector.load %arg0[%c0, %c0_0] : memref<8x768xbf16, #tpu.memory_space<vmem>>, vector<8x768xbf16>
    %c0_1 = arith.constant 0 : index
    %c0_2 = arith.constant 0 : index
    %1 = vector.load %arg1[%c0_1, %c0_2] : memref<1536x256xi8, #tpu.memory_space<vmem>>, vector<768x256xi8>
    %2 = arith.sitofp %1 : vector<768x256xi8> to vector<768x256xf32>
    %3 = arith.truncf %2 : vector<768x256xf32> to vector<768x256xbf16>
    %c768 = arith.constant 768 : index
    %c0_3 = arith.constant 0 : index
    %4 = vector.load %arg1[%c768, %c0_3] : memref<1536x256xi8, #tpu.memory_space<vmem>>, vector<768x256xi8>
    %5 = arith.sitofp %4 : vector<768x256xi8> to vector<768x256xf32>
    %6 = arith.truncf %5 : vector<768x256xf32> to vector<768x256xbf16>
    %cst = arith.constant dense<0.000000e+00> : vector<8x256xf32>
    %7 = tpu.matmul %0, %3, %cst {dimension_numbers = #tpu.dot_dimension_numbers<[1], [0], [0], [1], [0, 0, 1, 1], [], []>} : vector<8x768xbf16>, vector<768x256xbf16>, vector<8x256xf32> -> vector<8x256xf32>
    %cst_4 = arith.constant dense<0.000000e+00> : vector<8x256xf32>
    %8 = tpu.matmul %0, %6, %cst_4 {dimension_numbers = #tpu.dot_dimension_numbers<[1], [0], [0], [1], [0, 0, 1, 1], [], []>} : vector<8x768xbf16>, vector<768x256xbf16>, vector<8x256xf32> -> vector<8x256xf32>
    %c0_5 = arith.constant 0 : index
    %c0_6 = arith.constant 0 : index
    %9 = vector.load %arg2[%c0_5, %c0_6] : memref<8x768xf32, #tpu.memory_space<vmem>>, vector<8x256xf32>
    %c0_7 = arith.constant 0 : index
    %c256 = arith.constant 256 : index
    %10 = vector.load %arg2[%c0_7, %c256] : memref<8x768xf32, #tpu.memory_space<vmem>>, vector<8x256xf32>
    %c0_8 = arith.constant 0 : index
    %c512 = arith.constant 512 : index
    %11 = vector.load %arg2[%c0_8, %c512] : memref<8x768xf32, #tpu.memory_space<vmem>>, vector<8x128xf32>
    %c0_9 = arith.constant 0 : index
    %c640 = arith.constant 640 : index
    %12 = vector.load %arg2[%c0_9, %c640] : memref<8x768xf32, #tpu.memory_space<vmem>>, vector<8x128xf32>
    %13 = tpu.iota {dimensions = array<i32: 0>} : vector<8x256xi32>
    %c2_i32 = arith.constant 2 : i32
    %14 = vector.broadcast %c2_i32 : i32 to vector<8x256xi32>
    %15 = arith.cmpi slt, %13, %14 : vector<8x256xi32>
    %16 = arith.select %15, %7, %8 : vector<8x256xi1>, vector<8x256xf32>
    %17 = arith.mulf %16, %9 : vector<8x256xf32>
    %18 = arith.addf %17, %10 : vector<8x256xf32>
    %cst_10 = arith.constant 0.000000e+00 : f32
    %19 = vector.broadcast %cst_10 : f32 to vector<8x256xf32>
    %20 = arith.maximumf %18, %19 : vector<8x256xf32>
    %21 = arith.truncf %20 : vector<8x256xf32> to vector<8x256xbf16>
    %c0_11 = arith.constant 0 : index
    %c0_12 = arith.constant 0 : index
    %22 = vector.load %arg3[%c0_11, %c0_12] : memref<256x32xbf16, #tpu.memory_space<vmem>>, vector<256x32xbf16>
    %cst_13 = arith.constant dense<0.000000e+00> : vector<8x32xf32>
    %23 = tpu.matmul %21, %22, %cst_13 {dimension_numbers = #tpu.dot_dimension_numbers<[1], [0], [0], [1], [0, 0, 1, 1], [], []>} : vector<8x256xbf16>, vector<256x32xbf16>, vector<8x32xf32> -> vector<8x32xf32>
    %cst_14 = arith.constant 0.000000e+00 : f32
    %24 = vector.broadcast %cst_14 : f32 to vector<8x32xf32>
    %25 = arith.maximumf %23, %24 : vector<8x32xf32>
    %26 = arith.truncf %25 : vector<8x32xf32> to vector<8x32xbf16>
    %c0_15 = arith.constant 0 : index
    %c0_16 = arith.constant 0 : index
    %27 = vector.load %arg4[%c0_15, %c0_16] : memref<32x512xbf16, #tpu.memory_space<vmem>>, vector<32x512xbf16>
    %cst_17 = arith.constant dense<0.000000e+00> : vector<8x512xf32>
    %28 = tpu.matmul %26, %27, %cst_17 {dimension_numbers = #tpu.dot_dimension_numbers<[1], [0], [0], [1], [0, 0, 1, 1], [], []>} : vector<8x32xbf16>, vector<32x512xbf16>, vector<8x512xf32> -> vector<8x512xf32>
    %29 = vector.extract_strided_slice %28 {offsets = [0, 0], sizes = [8, 256], strides = [1, 1]} : vector<8x512xf32> to vector<8x256xf32>
    %30 = vector.extract_strided_slice %28 {offsets = [0, 256], sizes = [8, 256], strides = [1, 1]} : vector<8x512xf32> to vector<8x256xf32>
    %31 = arith.select %15, %29, %30 : vector<8x256xi1>, vector<8x256xf32>
    %32 = arith.negf %31 : vector<8x256xf32>
    %33 = math.exp %32 : vector<8x256xf32>
    %cst_18 = arith.constant 1.000000e+00 : f32
    %34 = vector.broadcast %cst_18 : f32 to vector<8x256xf32>
    %35 = arith.addf %34, %33 : vector<8x256xf32>
    %36 = arith.divf %34, %35 : vector<8x256xf32>
    %37 = tpu.iota {dimensions = array<i32: 0>} : vector<8x8xi32>
    %38 = tpu.iota {dimensions = array<i32: 1>} : vector<8x8xi32>
    %c2_i32_19 = arith.constant 2 : i32
    %39 = vector.broadcast %c2_i32_19 : i32 to vector<8x8xi32>
    %40 = arith.cmpi slt, %37, %39 : vector<8x8xi32>
    %c2_i32_20 = arith.constant 2 : i32
    %41 = vector.broadcast %c2_i32_20 : i32 to vector<8x8xi32>
    %42 = arith.addi %37, %41 : vector<8x8xi32>
    %c2_i32_21 = arith.constant 2 : i32
    %43 = vector.broadcast %c2_i32_21 : i32 to vector<8x8xi32>
    %44 = arith.subi %37, %43 : vector<8x8xi32>
    %45 = arith.select %40, %42, %44 : vector<8x8xi1>, vector<8x8xi32>
    %46 = arith.cmpi eq, %38, %45 : vector<8x8xi32>
    %47 = arith.extui %46 : vector<8x8xi1> to vector<8x8xi32>
    %48 = arith.sitofp %47 : vector<8x8xi32> to vector<8x8xf32>
    %cst_22 = arith.constant dense<0.000000e+00> : vector<8x256xf32>
    %49 = tpu.matmul %48, %20, %cst_22 {dimension_numbers = #tpu.dot_dimension_numbers<[1], [0], [0], [1], [0, 0, 1, 1], [], []>} : vector<8x8xf32>, vector<8x256xf32>, vector<8x256xf32> -> vector<8x256xf32>
    %cst_23 = arith.constant dense<0.000000e+00> : vector<8x256xf32>
    %50 = tpu.matmul %48, %36, %cst_23 {dimension_numbers = #tpu.dot_dimension_numbers<[1], [0], [0], [1], [0, 0, 1, 1], [], []>} : vector<8x8xf32>, vector<8x256xf32>, vector<8x256xf32> -> vector<8x256xf32>
    %51 = arith.mulf %20, %50 : vector<8x256xf32>
    %52 = arith.mulf %49, %36 : vector<8x256xf32>
    %53 = arith.addf %51, %52 : vector<8x256xf32>
    %54 = arith.truncf %53 : vector<8x256xf32> to vector<8x256xbf16>
    %c0_24 = arith.constant 0 : index
    %c0_25 = arith.constant 0 : index
    %55 = vector.load %arg5[%c0_24, %c0_25] : memref<256x128xbf16, #tpu.memory_space<vmem>>, vector<256x128xbf16>
    %cst_26 = arith.constant dense<0.000000e+00> : vector<8x128xf32>
    %56 = tpu.matmul %54, %55, %cst_26 {dimension_numbers = #tpu.dot_dimension_numbers<[1], [0], [0], [1], [0, 0, 1, 1], [], []>} : vector<8x256xbf16>, vector<256x128xbf16>, vector<8x128xf32> -> vector<8x128xf32>
    %57 = arith.addf %56, %11 : vector<8x128xf32>
    %58 = arith.negf %57 : vector<8x128xf32>
    %59 = math.exp %58 : vector<8x128xf32>
    %cst_27 = arith.constant 1.000000e+00 : f32
    %60 = vector.broadcast %cst_27 : f32 to vector<8x128xf32>
    %61 = arith.addf %60, %59 : vector<8x128xf32>
    %62 = arith.divf %60, %61 : vector<8x128xf32>
    %63 = arith.mulf %57, %62 : vector<8x128xf32>
    %64 = arith.truncf %63 : vector<8x128xf32> to vector<8x128xbf16>
    %c0_28 = arith.constant 0 : index
    %c0_29 = arith.constant 0 : index
    %65 = vector.load %arg6[%c0_28, %c0_29] : memref<128x128xbf16, #tpu.memory_space<vmem>>, vector<128x128xbf16>
    %cst_30 = arith.constant dense<0.000000e+00> : vector<8x128xf32>
    %66 = tpu.matmul %64, %65, %cst_30 {dimension_numbers = #tpu.dot_dimension_numbers<[1], [0], [0], [1], [0, 0, 1, 1], [], []>} : vector<8x128xbf16>, vector<128x128xbf16>, vector<8x128xf32> -> vector<8x128xf32>
    %67 = arith.addf %66, %12 : vector<8x128xf32>
    %c0_31 = arith.constant 0 : index
    %c0_32 = arith.constant 0 : index
    %68 = vector.load %arg7[%c0_31, %c0_32] : memref<8x128xf32, #tpu.memory_space<vmem>>, vector<8x128xf32>
    tpu.vector_store %arg7[%c0_31, %c0_32], %67 {strides = array<i32>} : memref<8x128xf32, #tpu.memory_space<vmem>>, vector<8x128xf32>,
    return
  }
}

</mosaic_0001>

<llo_original>
// kernel: tpu_custom_call.1
$region0: #{tpu_custom_call.1}
  #allocation0 [shape = 'u32[]', space=smem, size = 0x4, offset = 0x4, fixed_abs, tag = 'smem constant byte address 0x4 - core index']
  #allocation1 [shape = 'u32[72,128]{1,0:T(1,128)}', space=vmem, size = 0x9000, scoped, tag = 'internal scratch']
  %s0 = inlined_call_operand.vmem [shape: bf16[8,768], index: 0, kind: input, shape index: {}]
  %s1 = inlined_call_operand.hbm [shape: s8[1536,256], index: 1, kind: input, shape index: {}]
  %s2 = inlined_call_operand.hbm [shape: f32[8,768], index: 2, kind: input, shape index: {}]
  %s3 = inlined_call_operand.vmem [shape: bf16[256,32], index: 3, kind: input, shape index: {}]
  %s4 = inlined_call_operand.hbm [shape: bf16[32,512], index: 4, kind: input, shape index: {}]
  %s5 = inlined_call_operand.vmem [shape: bf16[256,128], index: 5, kind: input, shape index: {}]
  %s6 = inlined_call_operand.hbm [shape: bf16[128,128], index: 6, kind: input, shape index: {}]
  %s7 = inlined_call_operand.hbm [shape: f32[8,128], index: 7, kind: output, shape index: {}]
  %s8 = sld [smem:[#allocation0]]
  $region54: #{tpu_custom_call.1} parent=0
    _
  %s10 = ssub.s32 1, %s8
  %s11 = scalar_select 0, %s10, %s8
  $region1: #{tpu_custom_call.1} parent=0
    #allocation2 [shape = 'u8[393216]{0}', space=vmem, size = 0x60000, scoped, tag = 'input window, operand 1, single buffered']
    #allocation3 [shape = 's32[1]{0}', space=sflag, size = 0x4, scoped, tag = 'scoped memory for tpu_custom_call.1']
    #allocation4 [shape = 's32[1]{0}', space=sflag, size = 0x4, scoped, tag = 'scoped memory for tpu_custom_call.1']
    #allocation5 [shape = 'u8[24576]{0}', space=vmem, size = 0x6000, scoped, tag = 'input window, operand 2, single buffered']
    #allocation6 [shape = 's32[1]{0}', space=sflag, size = 0x4, scoped, tag = 'scoped memory for tpu_custom_call.1']
    #allocation7 [shape = 'u8[32768]{0}', space=vmem, size = 0x8000, scoped, tag = 'input window, operand 4, single buffered']
    #allocation8 [shape = 'u8[32768]{0}', space=vmem, size = 0x8000, scoped, tag = 'input window, operand 6, single buffered']
    #allocation9 [shape = 's32[1]{0}', space=sflag, size = 0x4, scoped, tag = 'scoped memory for tpu_custom_call.1']
    #allocation10 [shape = 'u8[4096]{0}', space=vmem, size = 0x1000, scoped, tag = 'output window, operand 0, single buffered']
    %12 = vsyncpa [#allocation3], 0
    %13 = vsyncpa [#allocation6], 0
    %14 = vsyncpa [#allocation9], 0
    %15 = vsyncpa [#allocation4], 0
    // Predicated region
    $region2: #{tpu_custom_call.1} parent=1 // pred_check
      _
    $region3: #{tpu_custom_call.1} parent=1 // pred_check_branch
      %17 = sbr.rel (0) target = $region5
    $region4: #{tpu_custom_call.1} parent=1 // pred_region
      _
    $region5: #{tpu_custom_call.1} parent=1 // pred_fallthru
      _
    // Predicated region
    $region6: #{tpu_custom_call.1} parent=1 // pred_check
      _
    $region7: #{tpu_custom_call.1} parent=1 // pred_check_branch
      %19 = sbr.rel (0) target = $region9
    $region8: #{tpu_custom_call.1} parent=1 // pred_region
      %21 = vsyncadd [#allocation3], 0
      %s22 = sshll.u32 %s1, 4
      %s23 = int_to_ptr.hbm [resolvable:$true] %s22
      %s24 = sshll.u32 [#allocation2], 4
      %s25 = int_to_ptr.vmem [resolvable:$true] %s24
      %30 = dma.hbm_to_vmem [thread:$0]  %s23, 12288, %s25, [#allocation3], 256, 256, 16
    $region9: #{tpu_custom_call.1} parent=1 // pred_fallthru
      _
    // Predicated region
    $region10: #{tpu_custom_call.1} parent=1 // pred_check
      _
    $region11: #{tpu_custom_call.1} parent=1 // pred_check_branch
      %32 = sbr.rel (0) target = $region13
    $region12: #{tpu_custom_call.1} parent=1 // pred_region
      %34 = vsyncadd [#allocation6], 0
      %s36 = sshll.u32 %s2, 4
      %s37 = int_to_ptr.hbm [resolvable:$true] %s36
      %s38 = sshll.u32 [#allocation5], 4
      %s39 = int_to_ptr.vmem [resolvable:$true] %s38
      %41 = dma.hbm_to_vmem [thread:$0]  %s37, 768, %s39, [#allocation6]
    $region13: #{tpu_custom_call.1} parent=1 // pred_fallthru
      _
    // Predicated region
    $region14: #{tpu_custom_call.1} parent=1 // pred_check
      _
    $region15: #{tpu_custom_call.1} parent=1 // pred_check_branch
      %43 = sbr.rel (0) target = $region17
    $region16: #{tpu_custom_call.1} parent=1 // pred_region
      _
    $region17: #{tpu_custom_call.1} parent=1 // pred_fallthru
      _
    // Predicated region
    $region18: #{tpu_custom_call.1} parent=1 // pred_check
      _
    $region19: #{tpu_custom_call.1} parent=1 // pred_check_branch
      %45 = sbr.rel (0) target = $region21
    $region20: #{tpu_custom_call.1} parent=1 // pred_region
      %47 = vsyncadd [#allocation6], 0
      %s48 = sshll.u32 %s4, 4
      %s49 = int_to_ptr.hbm [resolvable:$true] %s48
      %s50 = sshll.u32 [#allocation7], 4
      %s51 = int_to_ptr.vmem [resolvable:$true] %s50
      %56 = dma.hbm_to_vmem [thread:$0]  %s49, 1024, %s51, [#allocation6], 256, 256, 16
    $region21: #{tpu_custom_call.1} parent=1 // pred_fallthru
      _
    // Predicated region
    $region22: #{tpu_custom_call.1} parent=1 // pred_check
      _
    $region23: #{tpu_custom_call.1} parent=1 // pred_check_branch
      %58 = sbr.rel (0) target = $region25
    $region24: #{tpu_custom_call.1} parent=1 // pred_region
      _
    $region25: #{tpu_custom_call.1} parent=1 // pred_fallthru
      _
    // Predicated region
    $region26: #{tpu_custom_call.1} parent=1 // pred_check
      _
    $region27: #{tpu_custom_call.1} parent=1 // pred_check_branch
      %60 = sbr.rel (0) target = $region29
    $region28: #{tpu_custom_call.1} parent=1 // pred_region
      %62 = vsyncadd [#allocation9], 0
      %s63 = sshll.u32 %s6, 4
      %s64 = int_to_ptr.hbm [resolvable:$true] %s63
      %s65 = sshll.u32 [#allocation8], 4
      %s66 = int_to_ptr.vmem [resolvable:$true] %s65
      %71 = dma.hbm_to_vmem [thread:$0]  %s64, 1024, %s66, [#allocation9], 64, 64, 4
    $region29: #{tpu_custom_call.1} parent=1 // pred_fallthru
      _
    // Predicated region
    $region30: #{tpu_custom_call.1} parent=1 // pred_check
      _
    $region31: #{tpu_custom_call.1} parent=1 // pred_check_branch
      %73 = sbr.rel (0) target = $region33
    $region32: #{tpu_custom_call.1} parent=1 // pred_region
      %75 = dma.done [#allocation3], 12288
    $region33: #{tpu_custom_call.1} parent=1 // pred_fallthru
      _
    // Predicated region
    $region34: #{tpu_custom_call.1} parent=1 // pred_check
      _
    $region35: #{tpu_custom_call.1} parent=1 // pred_check_branch
      %77 = sbr.rel (0) target = $region37
    $region36: #{tpu_custom_call.1} parent=1 // pred_region
      %79 = dma.done [#allocation6], 768
    $region37: #{tpu_custom_call.1} parent=1 // pred_fallthru
      _
    // Predicated region
    $region38: #{tpu_custom_call.1} parent=1 // pred_check
      _
    $region39: #{tpu_custom_call.1} parent=1 // pred_check_branch
      %81 = sbr.rel (0) target = $region41
    $region40: #{tpu_custom_call.1} parent=1 // pred_region
      %83 = dma.done [#allocation6], 1024
    $region41: #{tpu_custom_call.1} parent=1 // pred_fallthru
      _
    // Predicated region
    $region42: #{tpu_custom_call.1} parent=1 // pred_check
      _
    $region43: #{tpu_custom_call.1} parent=1 // pred_check_branch
      %85 = sbr.rel (0) target = $region45
    $region44: #{tpu_custom_call.1} parent=1 // pred_region
      %87 = dma.done [#allocation9], 1024
    $region45: #{tpu_custom_call.1} parent=1 // pred_fallthru
      _
    %v89 = vld [vmem:[%s0] sm:$0xff]
    %v90 = vld [vmem:[%s0 + $0x8] sm:$0xff]
    %v91 = vld [vmem:[%s0 + $0x10] sm:$0xff]
    %v92 = vld [vmem:[#allocation2] sm:$0xff]
    %v93 = vld [vmem:[#allocation2 + $0x8] sm:$0xff]
    %v94 = vld [vmem:[#allocation2 + $0x10] sm:$0xff]
    %v95 = vld [vmem:[#allocation2 + $0x18] sm:$0xff]
    %v96 = vld [vmem:[#allocation2 + $0x20] sm:$0xff]
    %v97 = vld [vmem:[#allocation2 + $0x28] sm:$0xff]
    %v98 = vld [vmem:[#allocation2 + $0x30] sm:$0xff]
    %v99 = vld [vmem:[#allocation2 + $0x38] sm:$0xff]
    %v100 = vld [vmem:[#allocation2 + $0x40] sm:$0xff]
    %v101 = vld [vmem:[#allocation2 + $0x48] sm:$0xff]
    %v102 = vld [vmem:[#allocation2 + $0x50] sm:$0xff]
    %v103 = vld [vmem:[#allocation2 + $0x58] sm:$0xff]
    %v104 = vld [vmem:[#allocation2 + $0x60] sm:$0xff]
    %v105 = vld [vmem:[#allocation2 + $0x68] sm:$0xff]
    %v106 = vld [vmem:[#allocation2 + $0x70] sm:$0xff]
    %v107 = vld [vmem:[#allocation2 + $0x78] sm:$0xff]
    %v108 = vld [vmem:[#allocation2 + $0x80] sm:$0xff]
    %v109 = vld [vmem:[#allocation2 + $0x88] sm:$0xff]
    %v110 = vld [vmem:[#allocation2 + $0x90] sm:$0xff]
    %v111 = vld [vmem:[#allocation2 + $0x98] sm:$0xff]
    %v112 = vld [vmem:[#allocation2 + $0xa0] sm:$0xff]
    %v113 = vld [vmem:[#allocation2 + $0xa8] sm:$0xff]
    %v114 = vld [vmem:[#allocation2 + $0xb0] sm:$0xff]
    %v115 = vld [vmem:[#allocation2 + $0xb8] sm:$0xff]
    %v116 = vld [vmem:[#allocation2 + $0xc0] sm:$0xff]
    %v117 = vld [vmem:[#allocation2 + $0xc8] sm:$0xff]
    %v118 = vld [vmem:[#allocation2 + $0xd0] sm:$0xff]
    %v119 = vld [vmem:[#allocation2 + $0xd8] sm:$0xff]
    %v120 = vld [vmem:[#allocation2 + $0xe0] sm:$0xff]
    %v121 = vld [vmem:[#allocation2 + $0xe8] sm:$0xff]
    %v122 = vld [vmem:[#allocation2 + $0xf0] sm:$0xff]
    %v123 = vld [vmem:[#allocation2 + $0xf8] sm:$0xff]
    %v124 = vld [vmem:[#allocation2 + $0x100] sm:$0xff]
    %v125 = vld [vmem:[#allocation2 + $0x108] sm:$0xff]
    %v126 = vld [vmem:[#allocation2 + $0x110] sm:$0xff]
    %v127 = vld [vmem:[#allocation2 + $0x118] sm:$0xff]
    %v128 = vld [vmem:[#allocation2 + $0x120] sm:$0xff]
    %v129 = vld [vmem:[#allocation2 + $0x128] sm:$0xff]
    %v130 = vld [vmem:[#allocation2 + $0x130] sm:$0xff]
    %v131 = vld [vmem:[#allocation2 + $0x138] sm:$0xff]
    %v132 = vld [vmem:[#allocation2 + $0x140] sm:$0xff]
    %v133 = vld [vmem:[#allocation2 + $0x148] sm:$0xff]
    %v134 = vld [vmem:[#allocation2 + $0x150] sm:$0xff]
    %v135 = vld [vmem:[#allocation2 + $0x158] sm:$0xff]
    %v136 = vld [vmem:[#allocation2 + $0x160] sm:$0xff]
    %v137 = vld [vmem:[#allocation2 + $0x168] sm:$0xff]
    %v138 = vld [vmem:[#allocation2 + $0x170] sm:$0xff]
    %v139 = vld [vmem:[#allocation2 + $0x178] sm:$0xff]
    %v140 = vunpack.c.0.s8 %v92
    %v141 = vunpack.c.0.s8 %v93
    %v142 = vunpack.c.1.s8 %v92
    %v143 = vunpack.c.1.s8 %v93
    %v144 = vunpack.c.2.s8 %v92
    %v145 = vunpack.c.2.s8 %v93
    %v146 = vunpack.c.3.s8 %v92
    %v147 = vunpack.c.3.s8 %v93
    %v148 = vunpack.c.0.s8 %v94
    %v149 = vunpack.c.0.s8 %v95
    %v150 = vunpack.c.1.s8 %v94
    %v151 = vunpack.c.1.s8 %v95
    %v152 = vunpack.c.2.s8 %v94
    %v153 = vunpack.c.2.s8 %v95
    %v154 = vunpack.c.3.s8 %v94
    %v155 = vunpack.c.3.s8 %v95
    %v156 = vunpack.c.0.s8 %v96
    %v157 = vunpack.c.0.s8 %v97
    %v158 = vunpack.c.1.s8 %v96
    %v159 = vunpack.c.1.s8 %v97
    %v160 = vunpack.c.2.s8 %v96
    %v161 = vunpack.c.2.s8 %v97
    %v162 = vunpack.c.3.s8 %v96
    %v163 = vunpack.c.3.s8 %v97
    %v164 = vunpack.c.0.s8 %v98
    %v165 = vunpack.c.0.s8 %v99
    %v166 = vunpack.c.1.s8 %v98
    %v167 = vunpack.c.1.s8 %v99
    %v168 = vunpack.c.2.s8 %v98
    %v169 = vunpack.c.2.s8 %v99
    %v170 = vunpack.c.3.s8 %v98
    %v171 = vunpack.c.3.s8 %v99
    %v172 = vunpack.c.0.s8 %v100
    %v173 = vunpack.c.0.s8 %v101
    %v174 = vunpack.c.1.s8 %v100
    %v175 = vunpack.c.1.s8 %v101
    %v176 = vunpack.c.2.s8 %v100
    %v177 = vunpack.c.2.s8 %v101
    %v178 = vunpack.c.3.s8 %v100
    %v179 = vunpack.c.3.s8 %v101
    %v180 = vunpack.c.0.s8 %v102
    %v181 = vunpack.c.0.s8 %v103
    %v182 = vunpack.c.1.s8 %v102
    %v183 = vunpack.c.1.s8 %v103
    %v184 = vunpack.c.2.s8 %v102
    %v185 = vunpack.c.2.s8 %v103
    %v186 = vunpack.c.3.s8 %v102
    %v187 = vunpack.c.3.s8 %v103
    %v188 = vunpack.c.0.s8 %v104
    %v189 = vunpack.c.0.s8 %v105
    %v190 = vunpack.c.1.s8 %v104
    %v191 = vunpack.c.1.s8 %v105
    %v192 = vunpack.c.2.s8 %v104
    %v193 = vunpack.c.2.s8 %v105
    %v194 = vunpack.c.3.s8 %v104
    %v195 = vunpack.c.3.s8 %v105
    %v196 = vunpack.c.0.s8 %v106
    %v197 = vunpack.c.0.s8 %v107
    %v198 = vunpack.c.1.s8 %v106
    %v199 = vunpack.c.1.s8 %v107
    %v200 = vunpack.c.2.s8 %v106
    %v201 = vunpack.c.2.s8 %v107
    %v202 = vunpack.c.3.s8 %v106
    %v203 = vunpack.c.3.s8 %v107
    %v204 = vunpack.c.0.s8 %v108
    %v205 = vunpack.c.0.s8 %v109
    %v206 = vunpack.c.1.s8 %v108
    %v207 = vunpack.c.1.s8 %v109
    %v208 = vunpack.c.2.s8 %v108
    %v209 = vunpack.c.2.s8 %v109
    %v210 = vunpack.c.3.s8 %v108
    %v211 = vunpack.c.3.s8 %v109
    %v212 = vunpack.c.0.s8 %v110
    %v213 = vunpack.c.0.s8 %v111
    %v214 = vunpack.c.1.s8 %v110
    %v215 = vunpack.c.1.s8 %v111
    %v216 = vunpack.c.2.s8 %v110
    %v217 = vunpack.c.2.s8 %v111
    %v218 = vunpack.c.3.s8 %v110
    %v219 = vunpack.c.3.s8 %v111
    %v220 = vunpack.c.0.s8 %v112
    %v221 = vunpack.c.0.s8 %v113
    %v222 = vunpack.c.1.s8 %v112
    %v223 = vunpack.c.1.s8 %v113
    %v224 = vunpack.c.2.s8 %v112
    %v225 = vunpack.c.2.s8 %v113
    %v226 = vunpack.c.3.s8 %v112
    %v227 = vunpack.c.3.s8 %v113
    %v228 = vunpack.c.0.s8 %v114
    %v229 = vunpack.c.0.s8 %v115
    %v230 = vunpack.c.1.s8 %v114
    %v231 = vunpack.c.1.s8 %v115
    %v232 = vunpack.c.2.s8 %v114
    %v233 = vunpack.c.2.s8 %v115
    %v234 = vunpack.c.3.s8 %v114
    %v235 = vunpack.c.3.s8 %v115
    %v236 = vunpack.c.0.s8 %v116
    %v237 = vunpack.c.0.s8 %v117
    %v238 = vunpack.c.1.s8 %v116
    %v239 = vunpack.c.1.s8 %v117
    %v240 = vunpack.c.2.s8 %v116
    %v241 = vunpack.c.2.s8 %v117
    %v242 = vunpack.c.3.s8 %v116
    %v243 = vunpack.c.3.s8 %v117
    %v244 = vunpack.c.0.s8 %v118
    %v245 = vunpack.c.0.s8 %v119
    %v246 = vunpack.c.1.s8 %v118
    %v247 = vunpack.c.1.s8 %v119
    %v248 = vunpack.c.2.s8 %v118
    %v249 = vunpack.c.2.s8 %v119
    %v250 = vunpack.c.3.s8 %v118
    %v251 = vunpack.c.3.s8 %v119
    %v252 = vunpack.c.0.s8 %v120
    %v253 = vunpack.c.0.s8 %v121
    %v254 = vunpack.c.1.s8 %v120
    %v255 = vunpack.c.1.s8 %v121
    %v256 = vunpack.c.2.s8 %v120
    %v257 = vunpack.c.2.s8 %v121
    %v258 = vunpack.c.3.s8 %v120
    %v259 = vunpack.c.3.s8 %v121
    %v260 = vunpack.c.0.s8 %v122
    %v261 = vunpack.c.0.s8 %v123
    %v262 = vunpack.c.1.s8 %v122
    %v263 = vunpack.c.1.s8 %v123
    %v264 = vunpack.c.2.s8 %v122
    %v265 = vunpack.c.2.s8 %v123
    %v266 = vunpack.c.3.s8 %v122
    %v267 = vunpack.c.3.s8 %v123
    %v268 = vunpack.c.0.s8 %v124
    %v269 = vunpack.c.0.s8 %v125
    %v270 = vunpack.c.1.s8 %v124
    %v271 = vunpack.c.1.s8 %v125
    %v272 = vunpack.c.2.s8 %v124
    %v273 = vunpack.c.2.s8 %v125
    %v274 = vunpack.c.3.s8 %v124
    %v275 = vunpack.c.3.s8 %v125
    %v276 = vunpack.c.0.s8 %v126
    %v277 = vunpack.c.0.s8 %v127
    %v278 = vunpack.c.1.s8 %v126
    %v279 = vunpack.c.1.s8 %v127
    %v280 = vunpack.c.2.s8 %v126
    %v281 = vunpack.c.2.s8 %v127
    %v282 = vunpack.c.3.s8 %v126
    %v283 = vunpack.c.3.s8 %v127
    %v284 = vunpack.c.0.s8 %v128
    %v285 = vunpack.c.0.s8 %v129
    %v286 = vunpack.c.1.s8 %v128
    %v287 = vunpack.c.1.s8 %v129
    %v288 = vunpack.c.2.s8 %v128
    %v289 = vunpack.c.2.s8 %v129
    %v290 = vunpack.c.3.s8 %v128
    %v291 = vunpack.c.3.s8 %v129
    %v292 = vunpack.c.0.s8 %v130
    %v293 = vunpack.c.0.s8 %v131
    %v294 = vunpack.c.1.s8 %v130
    %v295 = vunpack.c.1.s8 %v131
    %v296 = vunpack.c.2.s8 %v130
    %v297 = vunpack.c.2.s8 %v131
    %v298 = vunpack.c.3.s8 %v130
    %v299 = vunpack.c.3.s8 %v131
    %v300 = vunpack.c.0.s8 %v132
    %v301 = vunpack.c.0.s8 %v133
    %v302 = vunpack.c.1.s8 %v132
    %v303 = vunpack.c.1.s8 %v133
    %v304 = vunpack.c.2.s8 %v132
    %v305 = vunpack.c.2.s8 %v133
    %v306 = vunpack.c.3.s8 %v132
    %v307 = vunpack.c.3.s8 %v133
    %v308 = vunpack.c.0.s8 %v134
    %v309 = vunpack.c.0.s8 %v135
    %v310 = vunpack.c.1.s8 %v134
    %v311 = vunpack.c.1.s8 %v135
    %v312 = vunpack.c.2.s8 %v134
    %v313 = vunpack.c.2.s8 %v135
    %v314 = vunpack.c.3.s8 %v134
    %v315 = vunpack.c.3.s8 %v135
    %v316 = vunpack.c.0.s8 %v136
    %v317 = vunpack.c.0.s8 %v137
    %v318 = vunpack.c.1.s8 %v136
    %v319 = vunpack.c.1.s8 %v137
    %v320 = vunpack.c.2.s8 %v136
    %v321 = vunpack.c.2.s8 %v137
    %v322 = vunpack.c.3.s8 %v136
    %v323 = vunpack.c.3.s8 %v137
    %v324 = vunpack.c.0.s8 %v138
    %v325 = vunpack.c.0.s8 %v139
    %v326 = vunpack.c.1.s8 %v138
    %v327 = vunpack.c.1.s8 %v139
    %v328 = vunpack.c.2.s8 %v138
    %v329 = vunpack.c.2.s8 %v139
    %v330 = vunpack.c.3.s8 %v138
    %v331 = vunpack.c.3.s8 %v139
    %v332 = vcvt.s32.f32 %v140
    %v333 = vcvt.s32.f32 %v141
    %v334 = vcvt.s32.f32 %v142
    %v335 = vcvt.s32.f32 %v143
    %v336 = vcvt.s32.f32 %v144
    %v337 = vcvt.s32.f32 %v145
    %v338 = vcvt.s32.f32 %v146
    %v339 = vcvt.s32.f32 %v147
    %v340 = vcvt.s32.f32 %v148
    %v341 = vcvt.s32.f32 %v149
    %v342 = vcvt.s32.f32 %v150
    %v343 = vcvt.s32.f32 %v151
    %v344 = vcvt.s32.f32 %v152
    %v345 = vcvt.s32.f32 %v153
    %v346 = vcvt.s32.f32 %v154
    %v347 = vcvt.s32.f32 %v155
    %v348 = vcvt.s32.f32 %v156
    %v349 = vcvt.s32.f32 %v157
    %v350 = vcvt.s32.f32 %v158
    %v351 = vcvt.s32.f32 %v159
    %v352 = vcvt.s32.f32 %v160
    %v353 = vcvt.s32.f32 %v161
    %v354 = vcvt.s32.f32 %v162
    %v355 = vcvt.s32.f32 %v163
    %v356 = vcvt.s32.f32 %v164
    %v357 = vcvt.s32.f32 %v165
    %v358 = vcvt.s32.f32 %v166
    %v359 = vcvt.s32.f32 %v167
    %v360 = vcvt.s32.f32 %v168
    %v361 = vcvt.s32.f32 %v169
    %v362 = vcvt.s32.f32 %v170
    %v363 = vcvt.s32.f32 %v171
    %v364 = vcvt.s32.f32 %v172
    %v365 = vcvt.s32.f32 %v173
    %v366 = vcvt.s32.f32 %v174
    %v367 = vcvt.s32.f32 %v175
    %v368 = vcvt.s32.f32 %v176
    %v369 = vcvt.s32.f32 %v177
    %v370 = vcvt.s32.f32 %v178
    %v371 = vcvt.s32.f32 %v179
    %v372 = vcvt.s32.f32 %v180
    %v373 = vcvt.s32.f32 %v181
    %v374 = vcvt.s32.f32 %v182
    %v375 = vcvt.s32.f32 %v183
    %v376 = vcvt.s32.f32 %v184
    %v377 = vcvt.s32.f32 %v185
    %v378 = vcvt.s32.f32 %v186
    %v379 = vcvt.s32.f32 %v187
    %v380 = vcvt.s32.f32 %v188
    %v381 = vcvt.s32.f32 %v189
    %v382 = vcvt.s32.f32 %v190
    %v383 = vcvt.s32.f32 %v191
    %v384 = vcvt.s32.f32 %v192
    %v385 = vcvt.s32.f32 %v193
    %v386 = vcvt.s32.f32 %v194
    %v387 = vcvt.s32.f32 %v195
    %v388 = vcvt.s32.f32 %v196
    %v389 = vcvt.s32.f32 %v197
    %v390 = vcvt.s32.f32 %v198
    %v391 = vcvt.s32.f32 %v199
    %v392 = vcvt.s32.f32 %v200
    %v393 = vcvt.s32.f32 %v201
    %v394 = vcvt.s32.f32 %v202
    %v395 = vcvt.s32.f32 %v203
    %v396 = vcvt.s32.f32 %v204
    %v397 = vcvt.s32.f32 %v205
    %v398 = vcvt.s32.f32 %v206
    %v399 = vcvt.s32.f32 %v207
    %v400 = vcvt.s32.f32 %v208
    %v401 = vcvt.s32.f32 %v209
    %v402 = vcvt.s32.f32 %v210
    %v403 = vcvt.s32.f32 %v211
    %v404 = vcvt.s32.f32 %v212
    %v405 = vcvt.s32.f32 %v213
    %v406 = vcvt.s32.f32 %v214
    %v407 = vcvt.s32.f32 %v215
    %v408 = vcvt.s32.f32 %v216
    %v409 = vcvt.s32.f32 %v217
    %v410 = vcvt.s32.f32 %v218
    %v411 = vcvt.s32.f32 %v219
    %v412 = vcvt.s32.f32 %v220
    %v413 = vcvt.s32.f32 %v221
    %v414 = vcvt.s32.f32 %v222
    %v415 = vcvt.s32.f32 %v223
    %v416 = vcvt.s32.f32 %v224
    %v417 = vcvt.s32.f32 %v225
    %v418 = vcvt.s32.f32 %v226
    %v419 = vcvt.s32.f32 %v227
    %v420 = vcvt.s32.f32 %v228
    %v421 = vcvt.s32.f32 %v229
    %v422 = vcvt.s32.f32 %v230
    %v423 = vcvt.s32.f32 %v231
    %v424 = vcvt.s32.f32 %v232
    %v425 = vcvt.s32.f32 %v233
    %v426 = vcvt.s32.f32 %v234
    %v427 = vcvt.s32.f32 %v235
    %v428 = vcvt.s32.f32 %v236
    %v429 = vcvt.s32.f32 %v237
    %v430 = vcvt.s32.f32 %v238
    %v431 = vcvt.s32.f32 %v239
    %v432 = vcvt.s32.f32 %v240
    %v433 = vcvt.s32.f32 %v241
    %v434 = vcvt.s32.f32 %v242
    %v435 = vcvt.s32.f32 %v243
    %v436 = vcvt.s32.f32 %v244
    %v437 = vcvt.s32.f32 %v245
    %v438 = vcvt.s32.f32 %v246
    %v439 = vcvt.s32.f32 %v247
    %v440 = vcvt.s32.f32 %v248
    %v441 = vcvt.s32.f32 %v249
    %v442 = vcvt.s32.f32 %v250
    %v443 = vcvt.s32.f32 %v251
    %v444 = vcvt.s32.f32 %v252
    %v445 = vcvt.s32.f32 %v253
    %v446 = vcvt.s32.f32 %v254
    %v447 = vcvt.s32.f32 %v255
    %v448 = vcvt.s32.f32 %v256
    %v449 = vcvt.s32.f32 %v257
    %v450 = vcvt.s32.f32 %v258
    %v451 = vcvt.s32.f32 %v259
    %v452 = vcvt.s32.f32 %v260
    %v453 = vcvt.s32.f32 %v261
    %v454 = vcvt.s32.f32 %v262
    %v455 = vcvt.s32.f32 %v263
    %v456 = vcvt.s32.f32 %v264
    %v457 = vcvt.s32.f32 %v265
    %v458 = vcvt.s32.f32 %v266
    %v459 = vcvt.s32.f32 %v267
    %v460 = vcvt.s32.f32 %v268
    %v461 = vcvt.s32.f32 %v269
    %v462 = vcvt.s32.f32 %v270
    %v463 = vcvt.s32.f32 %v271
    %v464 = vcvt.s32.f32 %v272
    %v465 = vcvt.s32.f32 %v273
    %v466 = vcvt.s32.f32 %v274
    %v467 = vcvt.s32.f32 %v275
    %v468 = vcvt.s32.f32 %v276
    %v469 = vcvt.s32.f32 %v277
    %v470 = vcvt.s32.f32 %v278
    %v471 = vcvt.s32.f32 %v279
    %v472 = vcvt.s32.f32 %v280
    %v473 = vcvt.s32.f32 %v281
    %v474 = vcvt.s32.f32 %v282
    %v475 = vcvt.s32.f32 %v283
    %v476 = vcvt.s32.f32 %v284
    %v477 = vcvt.s32.f32 %v285
    %v478 = vcvt.s32.f32 %v286
    %v479 = vcvt.s32.f32 %v287
    %v480 = vcvt.s32.f32 %v288
    %v481 = vcvt.s32.f32 %v289
    %v482 = vcvt.s32.f32 %v290
    %v483 = vcvt.s32.f32 %v291
    %v484 = vcvt.s32.f32 %v292
    %v485 = vcvt.s32.f32 %v293
    %v486 = vcvt.s32.f32 %v294
    %v487 = vcvt.s32.f32 %v295
    %v488 = vcvt.s32.f32 %v296
    %v489 = vcvt.s32.f32 %v297
    %v490 = vcvt.s32.f32 %v298
    %v491 = vcvt.s32.f32 %v299
    %v492 = vcvt.s32.f32 %v300
    %v493 = vcvt.s32.f32 %v301
    %v494 = vcvt.s32.f32 %v302
    %v495 = vcvt.s32.f32 %v303
    %v496 = vcvt.s32.f32 %v304
    %v497 = vcvt.s32.f32 %v305
    %v498 = vcvt.s32.f32 %v306
    %v499 = vcvt.s32.f32 %v307
    %v500 = vcvt.s32.f32 %v308
    %v501 = vcvt.s32.f32 %v309
    %v502 = vcvt.s32.f32 %v310
    %v503 = vcvt.s32.f32 %v311
    %v504 = vcvt.s32.f32 %v312
    %v505 = vcvt.s32.f32 %v313
    %v506 = vcvt.s32.f32 %v314
    %v507 = vcvt.s32.f32 %v315
    %v508 = vcvt.s32.f32 %v316
    %v509 = vcvt.s32.f32 %v317
    %v510 = vcvt.s32.f32 %v318
    %v511 = vcvt.s32.f32 %v319
    %v512 = vcvt.s32.f32 %v320
    %v513 = vcvt.s32.f32 %v321
    %v514 = vcvt.s32.f32 %v322
    %v515 = vcvt.s32.f32 %v323
    %v516 = vcvt.s32.f32 %v324
    %v517 = vcvt.s32.f32 %v325
    %v518 = vcvt.s32.f32 %v326
    %v519 = vcvt.s32.f32 %v327
    %v520 = vcvt.s32.f32 %v328
    %v521 = vcvt.s32.f32 %v329
    %v522 = vcvt.s32.f32 %v330
    %v523 = vcvt.s32.f32 %v331
    %v524 = vpack.c.bf16 %v334, %v332
    %v525 = vpack.c.bf16 %v335, %v333
    %v526 = vpack.c.bf16 %v338, %v336
    %v527 = vpack.c.bf16 %v339, %v337
    %v528 = vpack.c.bf16 %v342, %v340
    %v529 = vpack.c.bf16 %v343, %v341
    %v530 = vpack.c.bf16 %v346, %v344
    %v531 = vpack.c.bf16 %v347, %v345
    %v532 = vpack.c.bf16 %v350, %v348
    %v533 = vpack.c.bf16 %v351, %v349
    %v534 = vpack.c.bf16 %v354, %v352
    %v535 = vpack.c.bf16 %v355, %v353
    %v536 = vpack.c.bf16 %v358, %v356
    %v537 = vpack.c.bf16 %v359, %v357
    %v538 = vpack.c.bf16 %v362, %v360
    %v539 = vpack.c.bf16 %v363, %v361
    %v540 = vpack.c.bf16 %v366, %v364
    %v541 = vpack.c.bf16 %v367, %v365
    %v542 = vpack.c.bf16 %v370, %v368
    %v543 = vpack.c.bf16 %v371, %v369
    %v544 = vpack.c.bf16 %v374, %v372
    %v545 = vpack.c.bf16 %v375, %v373
    %v546 = vpack.c.bf16 %v378, %v376
    %v547 = vpack.c.bf16 %v379, %v377
    %v548 = vpack.c.bf16 %v382, %v380
    %v549 = vpack.c.bf16 %v383, %v381
    %v550 = vpack.c.bf16 %v386, %v384
    %v551 = vpack.c.bf16 %v387, %v385
    %v552 = vpack.c.bf16 %v390, %v388
    %v553 = vpack.c.bf16 %v391, %v389
    %v554 = vpack.c.bf16 %v394, %v392
    %v555 = vpack.c.bf16 %v395, %v393
    %v556 = vpack.c.bf16 %v398, %v396
    %v557 = vpack.c.bf16 %v399, %v397
    %v558 = vpack.c.bf16 %v402, %v400
    %v559 = vpack.c.bf16 %v403, %v401
    %v560 = vpack.c.bf16 %v406, %v404
    %v561 = vpack.c.bf16 %v407, %v405
    %v562 = vpack.c.bf16 %v410, %v408
    %v563 = vpack.c.bf16 %v411, %v409
    %v564 = vpack.c.bf16 %v414, %v412
    %v565 = vpack.c.bf16 %v415, %v413
    %v566 = vpack.c.bf16 %v418, %v416
    %v567 = vpack.c.bf16 %v419, %v417
    %v568 = vpack.c.bf16 %v422, %v420
    %v569 = vpack.c.bf16 %v423, %v421
    %v570 = vpack.c.bf16 %v426, %v424
    %v571 = vpack.c.bf16 %v427, %v425
    %v572 = vpack.c.bf16 %v430, %v428
    %v573 = vpack.c.bf16 %v431, %v429
    %v574 = vpack.c.bf16 %v434, %v432
    %v575 = vpack.c.bf16 %v435, %v433
    %v576 = vpack.c.bf16 %v438, %v436
    %v577 = vpack.c.bf16 %v439, %v437
    %v578 = vpack.c.bf16 %v442, %v440
    %v579 = vpack.c.bf16 %v443, %v441
    %v580 = vpack.c.bf16 %v446, %v444
    %v581 = vpack.c.bf16 %v447, %v445
    %v582 = vpack.c.bf16 %v450, %v448
    %v583 = vpack.c.bf16 %v451, %v449
    %v584 = vpack.c.bf16 %v454, %v452
    %v585 = vpack.c.bf16 %v455, %v453
    %v586 = vpack.c.bf16 %v458, %v456
    %v587 = vpack.c.bf16 %v459, %v457
    %v588 = vpack.c.bf16 %v462, %v460
    %v589 = vpack.c.bf16 %v463, %v461
    %v590 = vpack.c.bf16 %v466, %v464
    %v591 = vpack.c.bf16 %v467, %v465
    %v592 = vpack.c.bf16 %v470, %v468
    %v593 = vpack.c.bf16 %v471, %v469
    %v594 = vpack.c.bf16 %v474, %v472
    %v595 = vpack.c.bf16 %v475, %v473
    %v596 = vpack.c.bf16 %v478, %v476
    %v597 = vpack.c.bf16 %v479, %v477
    %v598 = vpack.c.bf16 %v482, %v480
    %v599 = vpack.c.bf16 %v483, %v481
    %v600 = vpack.c.bf16 %v486, %v484
    %v601 = vpack.c.bf16 %v487, %v485
    %v602 = vpack.c.bf16 %v490, %v488
    %v603 = vpack.c.bf16 %v491, %v489
    %v604 = vpack.c.bf16 %v494, %v492
    %v605 = vpack.c.bf16 %v495, %v493
    %v606 = vpack.c.bf16 %v498, %v496
    %v607 = vpack.c.bf16 %v499, %v497
    %v608 = vpack.c.bf16 %v502, %v500
    %v609 = vpack.c.bf16 %v503, %v501
    %v610 = vpack.c.bf16 %v506, %v504
    %v611 = vpack.c.bf16 %v507, %v505
    %v612 = vpack.c.bf16 %v510, %v508
    %v613 = vpack.c.bf16 %v511, %v509
    %v614 = vpack.c.bf16 %v514, %v512
    %v615 = vpack.c.bf16 %v515, %v513
    %v616 = vpack.c.bf16 %v518, %v516
    %v617 = vpack.c.bf16 %v519, %v517
    %v618 = vpack.c.bf16 %v522, %v520
    %v619 = vpack.c.bf16 %v523, %v521
    %v620 = vld [vmem:[#allocation2 + $0x180] sm:$0xff]
    %v621 = vld [vmem:[#allocation2 + $0x188] sm:$0xff]
    %v622 = vld [vmem:[#allocation2 + $0x190] sm:$0xff]
    %v623 = vld [vmem:[#allocation2 + $0x198] sm:$0xff]
    %v624 = vld [vmem:[#allocation2 + $0x1a0] sm:$0xff]
    %v625 = vld [vmem:[#allocation2 + $0x1a8] sm:$0xff]
    %v626 = vld [vmem:[#allocation2 + $0x1b0] sm:$0xff]
    %v627 = vld [vmem:[#allocation2 + $0x1b8] sm:$0xff]
    %v628 = vld [vmem:[#allocation2 + $0x1c0] sm:$0xff]
    %v629 = vld [vmem:[#allocation2 + $0x1c8] sm:$0xff]
    %v630 = vld [vmem:[#allocation2 + $0x1d0] sm:$0xff]
    %v631 = vld [vmem:[#allocation2 + $0x1d8] sm:$0xff]
    %v632 = vld [vmem:[#allocation2 + $0x1e0] sm:$0xff]
    %v633 = vld [vmem:[#allocation2 + $0x1e8] sm:$0xff]
    %v634 = vld [vmem:[#allocation2 + $0x1f0] sm:$0xff]
    %v635 = vld [vmem:[#allocation2 + $0x1f8] sm:$0xff]
    %v636 = vld [vmem:[#allocation2 + $0x200] sm:$0xff]
    %v637 = vld [vmem:[#allocation2 + $0x208] sm:$0xff]
    %v638 = vld [vmem:[#allocation2 + $0x210] sm:$0xff]
    %v639 = vld [vmem:[#allocation2 + $0x218] sm:$0xff]
    %v640 = vld [vmem:[#allocation2 + $0x220] sm:$0xff]
    %v641 = vld [vmem:[#allocation2 + $0x228] sm:$0xff]
    %v642 = vld [vmem:[#allocation2 + $0x230] sm:$0xff]
    %v643 = vld [vmem:[#allocation2 + $0x238] sm:$0xff]
    %v644 = vld [vmem:[#allocation2 + $0x240] sm:$0xff]
    %v645 = vld [vmem:[#allocation2 + $0x248] sm:$0xff]
    %v646 = vld [vmem:[#allocation2 + $0x250] sm:$0xff]
    %v647 = vld [vmem:[#allocation2 + $0x258] sm:$0xff]
    %v648 = vld [vmem:[#allocation2 + $0x260] sm:$0xff]
    %v649 = vld [vmem:[#allocation2 + $0x268] sm:$0xff]
    %v650 = vld [vmem:[#allocation2 + $0x270] sm:$0xff]
    %v651 = vld [vmem:[#allocation2 + $0x278] sm:$0xff]
    %v652 = vld [vmem:[#allocation2 + $0x280] sm:$0xff]
    %v653 = vld [vmem:[#allocation2 + $0x288] sm:$0xff]
    %v654 = vld [vmem:[#allocation2 + $0x290] sm:$0xff]
    %v655 = vld [vmem:[#allocation2 + $0x298] sm:$0xff]
    %v656 = vld [vmem:[#allocation2 + $0x2a0] sm:$0xff]
    %v657 = vld [vmem:[#allocation2 + $0x2a8] sm:$0xff]
    %v658 = vld [vmem:[#allocation2 + $0x2b0] sm:$0xff]
    %v659 = vld [vmem:[#allocation2 + $0x2b8] sm:$0xff]
    %v660 = vld [vmem:[#allocation2 + $0x2c0] sm:$0xff]
    %v661 = vld [vmem:[#allocation2 + $0x2c8] sm:$0xff]
    %v662 = vld [vmem:[#allocation2 + $0x2d0] sm:$0xff]
    %v663 = vld [vmem:[#allocation2 + $0x2d8] sm:$0xff]
    %v664 = vld [vmem:[#allocation2 + $0x2e0] sm:$0xff]
    %v665 = vld [vmem:[#allocation2 + $0x2e8] sm:$0xff]
    %v666 = vld [vmem:[#allocation2 + $0x2f0] sm:$0xff]
    %v667 = vld [vmem:[#allocation2 + $0x2f8] sm:$0xff]
    %v668 = vunpack.c.0.s8 %v620
    %v669 = vunpack.c.0.s8 %v621
    %v670 = vunpack.c.1.s8 %v620
    %v671 = vunpack.c.1.s8 %v621
    %v672 = vunpack.c.2.s8 %v620
    %v673 = vunpack.c.2.s8 %v621
    %v674 = vunpack.c.3.s8 %v620
    %v675 = vunpack.c.3.s8 %v621
    %v676 = vunpack.c.0.s8 %v622
    %v677 = vunpack.c.0.s8 %v623
    %v678 = vunpack.c.1.s8 %v622
    %v679 = vunpack.c.1.s8 %v623
    %v680 = vunpack.c.2.s8 %v622
    %v681 = vunpack.c.2.s8 %v623
    %v682 = vunpack.c.3.s8 %v622
    %v683 = vunpack.c.3.s8 %v623
    %v684 = vunpack.c.0.s8 %v624
    %v685 = vunpack.c.0.s8 %v625
    %v686 = vunpack.c.1.s8 %v624
    %v687 = vunpack.c.1.s8 %v625
    %v688 = vunpack.c.2.s8 %v624
    %v689 = vunpack.c.2.s8 %v625
    %v690 = vunpack.c.3.s8 %v624
    %v691 = vunpack.c.3.s8 %v625
    %v692 = vunpack.c.0.s8 %v626
    %v693 = vunpack.c.0.s8 %v627
    %v694 = vunpack.c.1.s8 %v626
    %v695 = vunpack.c.1.s8 %v627
    %v696 = vunpack.c.2.s8 %v626
    %v697 = vunpack.c.2.s8 %v627
    %v698 = vunpack.c.3.s8 %v626
    %v699 = vunpack.c.3.s8 %v627
    %v700 = vunpack.c.0.s8 %v628
    %v701 = vunpack.c.0.s8 %v629
    %v702 = vunpack.c.1.s8 %v628
    %v703 = vunpack.c.1.s8 %v629
    %v704 = vunpack.c.2.s8 %v628
    %v705 = vunpack.c.2.s8 %v629
    %v706 = vunpack.c.3.s8 %v628
    %v707 = vunpack.c.3.s8 %v629
    %v708 = vunpack.c.0.s8 %v630
    %v709 = vunpack.c.0.s8 %v631
    %v710 = vunpack.c.1.s8 %v630
    %v711 = vunpack.c.1.s8 %v631
    %v712 = vunpack.c.2.s8 %v630
    %v713 = vunpack.c.2.s8 %v631
    %v714 = vunpack.c.3.s8 %v630
    %v715 = vunpack.c.3.s8 %v631
    %v716 = vunpack.c.0.s8 %v632
    %v717 = vunpack.c.0.s8 %v633
    %v718 = vunpack.c.1.s8 %v632
    %v719 = vunpack.c.1.s8 %v633
    %v720 = vunpack.c.2.s8 %v632
    %v721 = vunpack.c.2.s8 %v633
    %v722 = vunpack.c.3.s8 %v632
    %v723 = vunpack.c.3.s8 %v633
    %v724 = vunpack.c.0.s8 %v634
    %v725 = vunpack.c.0.s8 %v635
    %v726 = vunpack.c.1.s8 %v634
    %v727 = vunpack.c.1.s8 %v635
    %v728 = vunpack.c.2.s8 %v634
    %v729 = vunpack.c.2.s8 %v635
    %v730 = vunpack.c.3.s8 %v634
    %v731 = vunpack.c.3.s8 %v635
    %v732 = vunpack.c.0.s8 %v636
    %v733 = vunpack.c.0.s8 %v637
    %v734 = vunpack.c.1.s8 %v636
    %v735 = vunpack.c.1.s8 %v637
    %v736 = vunpack.c.2.s8 %v636
    %v737 = vunpack.c.2.s8 %v637
    %v738 = vunpack.c.3.s8 %v636
    %v739 = vunpack.c.3.s8 %v637
    %v740 = vunpack.c.0.s8 %v638
    %v741 = vunpack.c.0.s8 %v639
    %v742 = vunpack.c.1.s8 %v638
    %v743 = vunpack.c.1.s8 %v639
    %v744 = vunpack.c.2.s8 %v638
    %v745 = vunpack.c.2.s8 %v639
    %v746 = vunpack.c.3.s8 %v638
    %v747 = vunpack.c.3.s8 %v639
    %v748 = vunpack.c.0.s8 %v640
    %v749 = vunpack.c.0.s8 %v641
    %v750 = vunpack.c.1.s8 %v640
    %v751 = vunpack.c.1.s8 %v641
    %v752 = vunpack.c.2.s8 %v640
    %v753 = vunpack.c.2.s8 %v641
    %v754 = vunpack.c.3.s8 %v640
    %v755 = vunpack.c.3.s8 %v641
    %v756 = vunpack.c.0.s8 %v642
    %v757 = vunpack.c.0.s8 %v643
    %v758 = vunpack.c.1.s8 %v642
    %v759 = vunpack.c.1.s8 %v643
    %v760 = vunpack.c.2.s8 %v642
    %v761 = vunpack.c.2.s8 %v643
    %v762 = vunpack.c.3.s8 %v642
    %v763 = vunpack.c.3.s8 %v643
    %v764 = vunpack.c.0.s8 %v644
    %v765 = vunpack.c.0.s8 %v645
    %v766 = vunpack.c.1.s8 %v644
    %v767 = vunpack.c.1.s8 %v645
    %v768 = vunpack.c.2.s8 %v644
    %v769 = vunpack.c.2.s8 %v645
    %v770 = vunpack.c.3.s8 %v644
    %v771 = vunpack.c.3.s8 %v645
    %v772 = vunpack.c.0.s8 %v646
    %v773 = vunpack.c.0.s8 %v647
    %v774 = vunpack.c.1.s8 %v646
    %v775 = vunpack.c.1.s8 %v647
    %v776 = vunpack.c.2.s8 %v646
    %v777 = vunpack.c.2.s8 %v647
    %v778 = vunpack.c.3.s8 %v646
    %v779 = vunpack.c.3.s8 %v647
    %v780 = vunpack.c.0.s8 %v648
    %v781 = vunpack.c.0.s8 %v649
    %v782 = vunpack.c.1.s8 %v648
    %v783 = vunpack.c.1.s8 %v649
    %v784 = vunpack.c.2.s8 %v648
    %v785 = vunpack.c.2.s8 %v649
    %v786 = vunpack.c.3.s8 %v648
    %v787 = vunpack.c.3.s8 %v649
    %v788 = vunpack.c.0.s8 %v650
    %v789 = vunpack.c.0.s8 %v651
    %v790 = vunpack.c.1.s8 %v650
    %v791 = vunpack.c.1.s8 %v651
    %v792 = vunpack.c.2.s8 %v650
    %v793 = vunpack.c.2.s8 %v651
    %v794 = vunpack.c.3.s8 %v650
    %v795 = vunpack.c.3.s8 %v651
    %v796 = vunpack.c.0.s8 %v652
    %v797 = vunpack.c.0.s8 %v653
    %v798 = vunpack.c.1.s8 %v652
    %v799 = vunpack.c.1.s8 %v653
    %v800 = vunpack.c.2.s8 %v652
    %v801 = vunpack.c.2.s8 %v653
    %v802 = vunpack.c.3.s8 %v652
    %v803 = vunpack.c.3.s8 %v653
    %v804 = vunpack.c.0.s8 %v654
    %v805 = vunpack.c.0.s8 %v655
    %v806 = vunpack.c.1.s8 %v654
    %v807 = vunpack.c.1.s8 %v655
    %v808 = vunpack.c.2.s8 %v654
    %v809 = vunpack.c.2.s8 %v655
    %v810 = vunpack.c.3.s8 %v654
    %v811 = vunpack.c.3.s8 %v655
    %v812 = vunpack.c.0.s8 %v656
    %v813 = vunpack.c.0.s8 %v657
    %v814 = vunpack.c.1.s8 %v656
    %v815 = vunpack.c.1.s8 %v657
    %v816 = vunpack.c.2.s8 %v656
    %v817 = vunpack.c.2.s8 %v657
    %v818 = vunpack.c.3.s8 %v656
    %v819 = vunpack.c.3.s8 %v657
    %v820 = vunpack.c.0.s8 %v658
    %v821 = vunpack.c.0.s8 %v659
    %v822 = vunpack.c.1.s8 %v658
    %v823 = vunpack.c.1.s8 %v659
    %v824 = vunpack.c.2.s8 %v658
    %v825 = vunpack.c.2.s8 %v659
    %v826 = vunpack.c.3.s8 %v658
    %v827 = vunpack.c.3.s8 %v659
    %v828 = vunpack.c.0.s8 %v660
    %v829 = vunpack.c.0.s8 %v661
    %v830 = vunpack.c.1.s8 %v660
    %v831 = vunpack.c.1.s8 %v661
    %v832 = vunpack.c.2.s8 %v660
    %v833 = vunpack.c.2.s8 %v661
    %v834 = vunpack.c.3.s8 %v660
    %v835 = vunpack.c.3.s8 %v661
    %v836 = vunpack.c.0.s8 %v662
    %v837 = vunpack.c.0.s8 %v663
    %v838 = vunpack.c.1.s8 %v662
    %v839 = vunpack.c.1.s8 %v663
    %v840 = vunpack.c.2.s8 %v662
    %v841 = vunpack.c.2.s8 %v663
    %v842 = vunpack.c.3.s8 %v662
    %v843 = vunpack.c.3.s8 %v663
    %v844 = vunpack.c.0.s8 %v664
    %v845 = vunpack.c.0.s8 %v665
    %v846 = vunpack.c.1.s8 %v664
    %v847 = vunpack.c.1.s8 %v665
    %v848 = vunpack.c.2.s8 %v664
    %v849 = vunpack.c.2.s8 %v665
    %v850 = vunpack.c.3.s8 %v664
    %v851 = vunpack.c.3.s8 %v665
    %v852 = vunpack.c.0.s8 %v666
    %v853 = vunpack.c.0.s8 %v667
    %v854 = vunpack.c.1.s8 %v666
    %v855 = vunpack.c.1.s8 %v667
    %v856 = vunpack.c.2.s8 %v666
    %v857 = vunpack.c.2.s8 %v667
    %v858 = vunpack.c.3.s8 %v666
    %v859 = vunpack.c.3.s8 %v667
    %v860 = vcvt.s32.f32 %v668
    %v861 = vcvt.s32.f32 %v669
    %v862 = vcvt.s32.f32 %v670
    %v863 = vcvt.s32.f32 %v671
    %v864 = vcvt.s32.f32 %v672
    %v865 = vcvt.s32.f32 %v673
    %v866 = vcvt.s32.f32 %v674
    %v867 = vcvt.s32.f32 %v675
    %v868 = vcvt.s32.f32 %v676
    %v869 = vcvt.s32.f32 %v677
    %v870 = vcvt.s32.f32 %v678
    %v871 = vcvt.s32.f32 %v679
    %v872 = vcvt.s32.f32 %v680
    %v873 = vcvt.s32.f32 %v681
    %v874 = vcvt.s32.f32 %v682
    %v875 = vcvt.s32.f32 %v683
    %v876 = vcvt.s32.f32 %v684
    %v877 = vcvt.s32.f32 %v685
    %v878 = vcvt.s32.f32 %v686
    %v879 = vcvt.s32.f32 %v687
    %v880 = vcvt.s32.f32 %v688
    %v881 = vcvt.s32.f32 %v689
    %v882 = vcvt.s32.f32 %v690
    %v883 = vcvt.s32.f32 %v691
    %v884 = vcvt.s32.f32 %v692
    %v885 = vcvt.s32.f32 %v693
    %v886 = vcvt.s32.f32 %v694
    %v887 = vcvt.s32.f32 %v695
    %v888 = vcvt.s32.f32 %v696
    %v889 = vcvt.s32.f32 %v697
    %v890 = vcvt.s32.f32 %v698
    %v891 = vcvt.s32.f32 %v699
    %v892 = vcvt.s32.f32 %v700
    %v893 = vcvt.s32.f32 %v701
    %v894 = vcvt.s32.f32 %v702
    %v895 = vcvt.s32.f32 %v703
    %v896 = vcvt.s32.f32 %v704
    %v897 = vcvt.s32.f32 %v705
    %v898 = vcvt.s32.f32 %v706
    %v899 = vcvt.s32.f32 %v707
    %v900 = vcvt.s32.f32 %v708
    %v901 = vcvt.s32.f32 %v709
    %v902 = vcvt.s32.f32 %v710
    %v903 = vcvt.s32.f32 %v711
    %v904 = vcvt.s32.f32 %v712
    %v905 = vcvt.s32.f32 %v713
    %v906 = vcvt.s32.f32 %v714
    %v907 = vcvt.s32.f32 %v715
    %v908 = vcvt.s32.f32 %v716
    %v909 = vcvt.s32.f32 %v717
    %v910 = vcvt.s32.f32 %v718
    %v911 = vcvt.s32.f32 %v719
    %v912 = vcvt.s32.f32 %v720
    %v913 = vcvt.s32.f32 %v721
    %v914 = vcvt.s32.f32 %v722
    %v915 = vcvt.s32.f32 %v723
    %v916 = vcvt.s32.f32 %v724
    %v917 = vcvt.s32.f32 %v725
    %v918 = vcvt.s32.f32 %v726
    %v919 = vcvt.s32.f32 %v727
    %v920 = vcvt.s32.f32 %v728
    %v921 = vcvt.s32.f32 %v729
    %v922 = vcvt.s32.f32 %v730
    %v923 = vcvt.s32.f32 %v731
    %v924 = vcvt.s32.f32 %v732
    %v925 = vcvt.s32.f32 %v733
    %v926 = vcvt.s32.f32 %v734
    %v927 = vcvt.s32.f32 %v735
    %v928 = vcvt.s32.f32 %v736
    %v929 = vcvt.s32.f32 %v737
    %v930 = vcvt.s32.f32 %v738
    %v931 = vcvt.s32.f32 %v739
    %v932 = vcvt.s32.f32 %v740
    %v933 = vcvt.s32.f32 %v741
    %v934 = vcvt.s32.f32 %v742
    %v935 = vcvt.s32.f32 %v743
    %v936 = vcvt.s32.f32 %v744
    %v937 = vcvt.s32.f32 %v745
    %v938 = vcvt.s32.f32 %v746
    %v939 = vcvt.s32.f32 %v747
    %v940 = vcvt.s32.f32 %v748
    %v941 = vcvt.s32.f32 %v749
    %v942 = vcvt.s32.f32 %v750
    %v943 = vcvt.s32.f32 %v751
    %v944 = vcvt.s32.f32 %v752
    %v945 = vcvt.s32.f32 %v753
    %v946 = vcvt.s32.f32 %v754
    %v947 = vcvt.s32.f32 %v755
    %v948 = vcvt.s32.f32 %v756
    %v949 = vcvt.s32.f32 %v757
    %v950 = vcvt.s32.f32 %v758
    %v951 = vcvt.s32.f32 %v759
    %v952 = vcvt.s32.f32 %v760
    %v953 = vcvt.s32.f32 %v761
    %v954 = vcvt.s32.f32 %v762
    %v955 = vcvt.s32.f32 %v763
    %v956 = vcvt.s32.f32 %v764
    %v957 = vcvt.s32.f32 %v765
    %v958 = vcvt.s32.f32 %v766
    %v959 = vcvt.s32.f32 %v767
    %v960 = vcvt.s32.f32 %v768
    %v961 = vcvt.s32.f32 %v769
    %v962 = vcvt.s32.f32 %v770
    %v963 = vcvt.s32.f32 %v771
    %v964 = vcvt.s32.f32 %v772
    %v965 = vcvt.s32.f32 %v773
    %v966 = vcvt.s32.f32 %v774
    %v967 = vcvt.s32.f32 %v775
    %v968 = vcvt.s32.f32 %v776
    %v969 = vcvt.s32.f32 %v777
    %v970 = vcvt.s32.f32 %v778
    %v971 = vcvt.s32.f32 %v779
    %v972 = vcvt.s32.f32 %v780
    %v973 = vcvt.s32.f32 %v781
    %v974 = vcvt.s32.f32 %v782
    %v975 = vcvt.s32.f32 %v783
    %v976 = vcvt.s32.f32 %v784
    %v977 = vcvt.s32.f32 %v785
    %v978 = vcvt.s32.f32 %v786
    %v979 = vcvt.s32.f32 %v787
    %v980 = vcvt.s32.f32 %v788
    %v981 = vcvt.s32.f32 %v789
    %v982 = vcvt.s32.f32 %v790
    %v983 = vcvt.s32.f32 %v791
    %v984 = vcvt.s32.f32 %v792
    %v985 = vcvt.s32.f32 %v793
    %v986 = vcvt.s32.f32 %v794
    %v987 = vcvt.s32.f32 %v795
    %v988 = vcvt.s32.f32 %v796
    %v989 = vcvt.s32.f32 %v797
    %v990 = vcvt.s32.f32 %v798
    %v991 = vcvt.s32.f32 %v799
    %v992 = vcvt.s32.f32 %v800
    %v993 = vcvt.s32.f32 %v801
    %v994 = vcvt.s32.f32 %v802
    %v995 = vcvt.s32.f32 %v803
    %v996 = vcvt.s32.f32 %v804
    %v997 = vcvt.s32.f32 %v805
    %v998 = vcvt.s32.f32 %v806
    %v999 = vcvt.s32.f32 %v807
    %v1000 = vcvt.s32.f32 %v808
    %v1001 = vcvt.s32.f32 %v809
    %v1002 = vcvt.s32.f32 %v810
    %v1003 = vcvt.s32.f32 %v811
    %v1004 = vcvt.s32.f32 %v812
    %v1005 = vcvt.s32.f32 %v813
    %v1006 = vcvt.s32.f32 %v814
    %v1007 = vcvt.s32.f32 %v815
    %v1008 = vcvt.s32.f32 %v816
    %v1009 = vcvt.s32.f32 %v817
    %v1010 = vcvt.s32.f32 %v818
    %v1011 = vcvt.s32.f32 %v819
    %v1012 = vcvt.s32.f32 %v820
    %v1013 = vcvt.s32.f32 %v821
    %v1014 = vcvt.s32.f32 %v822
    %v1015 = vcvt.s32.f32 %v823
    %v1016 = vcvt.s32.f32 %v824
    %v1017 = vcvt.s32.f32 %v825
    %v1018 = vcvt.s32.f32 %v826
    %v1019 = vcvt.s32.f32 %v827
    %v1020 = vcvt.s32.f32 %v828
    %v1021 = vcvt.s32.f32 %v829
    %v1022 = vcvt.s32.f32 %v830
    %v1023 = vcvt.s32.f32 %v831
    %v1024 = vcvt.s32.f32 %v832
    %v1025 = vcvt.s32.f32 %v833
    %v1026 = vcvt.s32.f32 %v834
    %v1027 = vcvt.s32.f32 %v835
    %v1028 = vcvt.s32.f32 %v836
    %v1029 = vcvt.s32.f32 %v837
    %v1030 = vcvt.s32.f32 %v838
    %v1031 = vcvt.s32.f32 %v839
    %v1032 = vcvt.s32.f32 %v840
    %v1033 = vcvt.s32.f32 %v841
    %v1034 = vcvt.s32.f32 %v842
    %v1035 = vcvt.s32.f32 %v843
    %v1036 = vcvt.s32.f32 %v844
    %v1037 = vcvt.s32.f32 %v845
    %v1038 = vcvt.s32.f32 %v846
    %v1039 = vcvt.s32.f32 %v847
    %v1040 = vcvt.s32.f32 %v848
    %v1041 = vcvt.s32.f32 %v849
    %v1042 = vcvt.s32.f32 %v850
    %v1043 = vcvt.s32.f32 %v851
    %v1044 = vcvt.s32.f32 %v852
    %v1045 = vcvt.s32.f32 %v853
    %v1046 = vcvt.s32.f32 %v854
    %v1047 = vcvt.s32.f32 %v855
    %v1048 = vcvt.s32.f32 %v856
    %v1049 = vcvt.s32.f32 %v857
    %v1050 = vcvt.s32.f32 %v858
    %v1051 = vcvt.s32.f32 %v859
    %v1052 = vpack.c.bf16 %v862, %v860
    %v1053 = vpack.c.bf16 %v863, %v861
    %v1054 = vpack.c.bf16 %v866, %v864
    %v1055 = vpack.c.bf16 %v867, %v865
    %v1056 = vpack.c.bf16 %v870, %v868
    %v1057 = vpack.c.bf16 %v871, %v869
    %v1058 = vpack.c.bf16 %v874, %v872
    %v1059 = vpack.c.bf16 %v875, %v873
    %v1060 = vpack.c.bf16 %v878, %v876
    %v1061 = vpack.c.bf16 %v879, %v877
    %v1062 = vpack.c.bf16 %v882, %v880
    %v1063 = vpack.c.bf16 %v883, %v881
    %v1064 = vpack.c.bf16 %v886, %v884
    %v1065 = vpack.c.bf16 %v887, %v885
    %v1066 = vpack.c.bf16 %v890, %v888
    %v1067 = vpack.c.bf16 %v891, %v889
    %v1068 = vpack.c.bf16 %v894, %v892
    %v1069 = vpack.c.bf16 %v895, %v893
    %v1070 = vpack.c.bf16 %v898, %v896
    %v1071 = vpack.c.bf16 %v899, %v897
    %v1072 = vpack.c.bf16 %v902, %v900
    %v1073 = vpack.c.bf16 %v903, %v901
    %v1074 = vpack.c.bf16 %v906, %v904
    %v1075 = vpack.c.bf16 %v907, %v905
    %v1076 = vpack.c.bf16 %v910, %v908
    %v1077 = vpack.c.bf16 %v911, %v909
    %v1078 = vpack.c.bf16 %v914, %v912
    %v1079 = vpack.c.bf16 %v915, %v913
    %v1080 = vpack.c.bf16 %v918, %v916
    %v1081 = vpack.c.bf16 %v919, %v917
    %v1082 = vpack.c.bf16 %v922, %v920
    %v1083 = vpack.c.bf16 %v923, %v921
    %v1084 = vpack.c.bf16 %v926, %v924
    %v1085 = vpack.c.bf16 %v927, %v925
    %v1086 = vpack.c.bf16 %v930, %v928
    %v1087 = vpack.c.bf16 %v931, %v929
    %v1088 = vpack.c.bf16 %v934, %v932
    %v1089 = vpack.c.bf16 %v935, %v933
    %v1090 = vpack.c.bf16 %v938, %v936
    %v1091 = vpack.c.bf16 %v939, %v937
    %v1092 = vpack.c.bf16 %v942, %v940
    %v1093 = vpack.c.bf16 %v943, %v941
    %v1094 = vpack.c.bf16 %v946, %v944
    %v1095 = vpack.c.bf16 %v947, %v945
    %v1096 = vpack.c.bf16 %v950, %v948
    %v1097 = vpack.c.bf16 %v951, %v949
    %v1098 = vpack.c.bf16 %v954, %v952
    %v1099 = vpack.c.bf16 %v955, %v953
    %v1100 = vpack.c.bf16 %v958, %v956
    %v1101 = vpack.c.bf16 %v959, %v957
    %v1102 = vpack.c.bf16 %v962, %v960
    %v1103 = vpack.c.bf16 %v963, %v961
    %v1104 = vpack.c.bf16 %v966, %v964
    %v1105 = vpack.c.bf16 %v967, %v965
    %v1106 = vpack.c.bf16 %v970, %v968
    %v1107 = vpack.c.bf16 %v971, %v969
    %v1108 = vpack.c.bf16 %v974, %v972
    %v1109 = vpack.c.bf16 %v975, %v973
    %v1110 = vpack.c.bf16 %v978, %v976
    %v1111 = vpack.c.bf16 %v979, %v977
    %v1112 = vpack.c.bf16 %v982, %v980
    %v1113 = vpack.c.bf16 %v983, %v981
    %v1114 = vpack.c.bf16 %v986, %v984
    %v1115 = vpack.c.bf16 %v987, %v985
    %v1116 = vpack.c.bf16 %v990, %v988
    %v1117 = vpack.c.bf16 %v991, %v989
    %v1118 = vpack.c.bf16 %v994, %v992
    %v1119 = vpack.c.bf16 %v995, %v993
    %v1120 = vpack.c.bf16 %v998, %v996
    %v1121 = vpack.c.bf16 %v999, %v997
    %v1122 = vpack.c.bf16 %v1002, %v1000
    %v1123 = vpack.c.bf16 %v1003, %v1001
    %v1124 = vpack.c.bf16 %v1006, %v1004
    %v1125 = vpack.c.bf16 %v1007, %v1005
    %v1126 = vpack.c.bf16 %v1010, %v1008
    %v1127 = vpack.c.bf16 %v1011, %v1009
    %v1128 = vpack.c.bf16 %v1014, %v1012
    %v1129 = vpack.c.bf16 %v1015, %v1013
    %v1130 = vpack.c.bf16 %v1018, %v1016
    %v1131 = vpack.c.bf16 %v1019, %v1017
    %v1132 = vpack.c.bf16 %v1022, %v1020
    %v1133 = vpack.c.bf16 %v1023, %v1021
    %v1134 = vpack.c.bf16 %v1026, %v1024
    %v1135 = vpack.c.bf16 %v1027, %v1025
    %v1136 = vpack.c.bf16 %v1030, %v1028
    %v1137 = vpack.c.bf16 %v1031, %v1029
    %v1138 = vpack.c.bf16 %v1034, %v1032
    %v1139 = vpack.c.bf16 %v1035, %v1033
    %v1140 = vpack.c.bf16 %v1038, %v1036
    %v1141 = vpack.c.bf16 %v1039, %v1037
    %v1142 = vpack.c.bf16 %v1042, %v1040
    %v1143 = vpack.c.bf16 %v1043, %v1041
    %v1144 = vpack.c.bf16 %v1046, %v1044
    %v1145 = vpack.c.bf16 %v1047, %v1045
    %v1146 = vpack.c.bf16 %v1050, %v1048
    %v1147 = vpack.c.bf16 %v1051, %v1049
    %v1151 = vunpack.c.l.b16 %v89
    %v1152 = vunpack.c.h.b16 %v89
    %v1153 = vunpack.c.l.b16 %v90
    %v1154 = vunpack.c.h.b16 %v90
    %v1155 = vunpack.c.l.b16 %v91
    %v1156 = vunpack.c.h.b16 %v91
    %v1157 = vpack.c.b16 %v1151, %v1151
    %v1158 = vpack.c.b16 %v1152, %v1152
    %v1159 = vpack.c.b16 %v1153, %v1153
    %v1160 = vpack.c.b16 %v1154, %v1154
    %v1161 = vpack.c.b16 %v1155, %v1155
    %v1162 = vpack.c.b16 %v1156, %v1156
    %1169 = vmatpush.bf16.msra.mxu0 %v538
    %1170 = vmatpush.bf16.msra.mxu0 %v536
    %1171 = vmatpush.bf16.msra.mxu0 %v534
    %1172 = vmatpush.bf16.msra.mxu0 %v532
    %1173 = vmatpush.bf16.msra.mxu0 %v530
    %1174 = vmatpush.bf16.msra.mxu0 %v528
    %1175 = vmatpush.bf16.msra.mxu0 %v526
    %1176 = vmatpush.bf16.msra.mxu0 %v524
    %1177 = vmatmul.bf16.gmra.mxu0 %v1157
    %v1178 = vpop.f32.mrf.mxu0
    %v1179 = vadd.f32 0.0, %v1178
    %v1180 = vpop.f32.mrf.mxu0
    %1181 = vdwg.mxu0
    %1182 = vmatpush.bf16.msra.mxu0 %v554
    %1183 = vmatpush.bf16.msra.mxu0 %v552
    %1184 = vmatpush.bf16.msra.mxu0 %v550
    %1185 = vmatpush.bf16.msra.mxu0 %v548
    %1186 = vmatpush.bf16.msra.mxu0 %v546
    %1187 = vmatpush.bf16.msra.mxu0 %v544
    %1188 = vmatpush.bf16.msra.mxu0 %v542
    %1189 = vmatpush.bf16.msra.mxu0 %v540
    %1190 = vmatmul.bf16.gmra.mxu0 %v1158
    %v1191 = vpop.f32.mrf.mxu0
    %v1192 = vadd.f32 %v1179, %v1191
    %v1193 = vpop.f32.mrf.mxu0
    %1194 = vdwg.mxu0
    %1195 = vmatpush.bf16.msra.mxu0 %v570
    %1196 = vmatpush.bf16.msra.mxu0 %v568
    %1197 = vmatpush.bf16.msra.mxu0 %v566
    %1198 = vmatpush.bf16.msra.mxu0 %v564
    %1199 = vmatpush.bf16.msra.mxu0 %v562
    %1200 = vmatpush.bf16.msra.mxu0 %v560
    %1201 = vmatpush.bf16.msra.mxu0 %v558
    %1202 = vmatpush.bf16.msra.mxu0 %v556
    %1203 = vmatmul.bf16.gmra.mxu0 %v1159
    %v1204 = vpop.f32.mrf.mxu0
    %v1205 = vadd.f32 %v1192, %v1204
    %v1206 = vpop.f32.mrf.mxu0
    %1207 = vdwg.mxu0
    %1208 = vmatpush.bf16.msra.mxu0 %v586
    %1209 = vmatpush.bf16.msra.mxu0 %v584
    %1210 = vmatpush.bf16.msra.mxu0 %v582
    %1211 = vmatpush.bf16.msra.mxu0 %v580
    %1212 = vmatpush.bf16.msra.mxu0 %v578
    %1213 = vmatpush.bf16.msra.mxu0 %v576
    %1214 = vmatpush.bf16.msra.mxu0 %v574
    %1215 = vmatpush.bf16.msra.mxu0 %v572
    %1216 = vmatmul.bf16.gmra.mxu0 %v1160
    %v1217 = vpop.f32.mrf.mxu0
    %v1218 = vadd.f32 %v1205, %v1217
    %v1219 = vpop.f32.mrf.mxu0
    %1220 = vdwg.mxu0
    %1221 = vmatpush.bf16.msra.mxu0 %v602
    %1222 = vmatpush.bf16.msra.mxu0 %v600
    %1223 = vmatpush.bf16.msra.mxu0 %v598
    %1224 = vmatpush.bf16.msra.mxu0 %v596
    %1225 = vmatpush.bf16.msra.mxu0 %v594
    %1226 = vmatpush.bf16.msra.mxu0 %v592
    %1227 = vmatpush.bf16.msra.mxu0 %v590
    %1228 = vmatpush.bf16.msra.mxu0 %v588
    %1229 = vmatmul.bf16.gmra.mxu0 %v1161
    %v1230 = vpop.f32.mrf.mxu0
    %v1231 = vadd.f32 %v1218, %v1230
    %v1232 = vpop.f32.mrf.mxu0
    %1233 = vdwg.mxu0
    %1234 = vmatpush.bf16.msra.mxu0 %v618
    %1235 = vmatpush.bf16.msra.mxu0 %v616
    %1236 = vmatpush.bf16.msra.mxu0 %v614
    %1237 = vmatpush.bf16.msra.mxu0 %v612
    %1238 = vmatpush.bf16.msra.mxu0 %v610
    %1239 = vmatpush.bf16.msra.mxu0 %v608
    %1240 = vmatpush.bf16.msra.mxu0 %v606
    %1241 = vmatpush.bf16.msra.mxu0 %v604
    %1242 = vmatmul.bf16.gmra.mxu0 %v1162
    %v1243 = vpop.f32.mrf.mxu0
    %v1244 = vadd.f32 %v1231, %v1243
    %v1245 = vpop.f32.mrf.mxu0
    %1246 = vdwg.mxu0
    %1247 = vmatpush.bf16.msra.mxu0 %v539
    %1248 = vmatpush.bf16.msra.mxu0 %v537
    %1249 = vmatpush.bf16.msra.mxu0 %v535
    %1250 = vmatpush.bf16.msra.mxu0 %v533
    %1251 = vmatpush.bf16.msra.mxu0 %v531
    %1252 = vmatpush.bf16.msra.mxu0 %v529
    %1253 = vmatpush.bf16.msra.mxu0 %v527
    %1254 = vmatpush.bf16.msra.mxu0 %v525
    %1255 = vmatmul.bf16.gmra.mxu0 %v1157
    %v1256 = vpop.f32.mrf.mxu0
    %v1257 = vadd.f32 0.0, %v1256
    %v1258 = vpop.f32.mrf.mxu0
    %1259 = vdwg.mxu0
    %1260 = vmatpush.bf16.msra.mxu0 %v555
    %1261 = vmatpush.bf16.msra.mxu0 %v553
    %1262 = vmatpush.bf16.msra.mxu0 %v551
    %1263 = vmatpush.bf16.msra.mxu0 %v549
    %1264 = vmatpush.bf16.msra.mxu0 %v547
    %1265 = vmatpush.bf16.msra.mxu0 %v545
    %1266 = vmatpush.bf16.msra.mxu0 %v543
    %1267 = vmatpush.bf16.msra.mxu0 %v541
    %1268 = vmatmul.bf16.gmra.mxu0 %v1158
    %v1269 = vpop.f32.mrf.mxu0
    %v1270 = vadd.f32 %v1257, %v1269
    %v1271 = vpop.f32.mrf.mxu0
    %1272 = vdwg.mxu0
    %1273 = vmatpush.bf16.msra.mxu0 %v571
    %1274 = vmatpush.bf16.msra.mxu0 %v569
    %1275 = vmatpush.bf16.msra.mxu0 %v567
    %1276 = vmatpush.bf16.msra.mxu0 %v565
    %1277 = vmatpush.bf16.msra.mxu0 %v563
    %1278 = vmatpush.bf16.msra.mxu0 %v561
    %1279 = vmatpush.bf16.msra.mxu0 %v559
    %1280 = vmatpush.bf16.msra.mxu0 %v557
    %1281 = vmatmul.bf16.gmra.mxu0 %v1159
    %v1282 = vpop.f32.mrf.mxu0
    %v1283 = vadd.f32 %v1270, %v1282
    %v1284 = vpop.f32.mrf.mxu0
    %1285 = vdwg.mxu0
    %1286 = vmatpush.bf16.msra.mxu0 %v587
    %1287 = vmatpush.bf16.msra.mxu0 %v585
    %1288 = vmatpush.bf16.msra.mxu0 %v583
    %1289 = vmatpush.bf16.msra.mxu0 %v581
    %1290 = vmatpush.bf16.msra.mxu0 %v579
    %1291 = vmatpush.bf16.msra.mxu0 %v577
    %1292 = vmatpush.bf16.msra.mxu0 %v575
    %1293 = vmatpush.bf16.msra.mxu0 %v573
    %1294 = vmatmul.bf16.gmra.mxu0 %v1160
    %v1295 = vpop.f32.mrf.mxu0
    %v1296 = vadd.f32 %v1283, %v1295
    %v1297 = vpop.f32.mrf.mxu0
    %1298 = vdwg.mxu0
    %1299 = vmatpush.bf16.msra.mxu0 %v603
    %1300 = vmatpush.bf16.msra.mxu0 %v601
    %1301 = vmatpush.bf16.msra.mxu0 %v599
    %1302 = vmatpush.bf16.msra.mxu0 %v597
    %1303 = vmatpush.bf16.msra.mxu0 %v595
    %1304 = vmatpush.bf16.msra.mxu0 %v593
    %1305 = vmatpush.bf16.msra.mxu0 %v591
    %1306 = vmatpush.bf16.msra.mxu0 %v589
    %1307 = vmatmul.bf16.gmra.mxu0 %v1161
    %v1308 = vpop.f32.mrf.mxu0
    %v1309 = vadd.f32 %v1296, %v1308
    %v1310 = vpop.f32.mrf.mxu0
    %1311 = vdwg.mxu0
    %1312 = vmatpush.bf16.msra.mxu0 %v619
    %1313 = vmatpush.bf16.msra.mxu0 %v617
    %1314 = vmatpush.bf16.msra.mxu0 %v615
    %1315 = vmatpush.bf16.msra.mxu0 %v613
    %1316 = vmatpush.bf16.msra.mxu0 %v611
    %1317 = vmatpush.bf16.msra.mxu0 %v609
    %1318 = vmatpush.bf16.msra.mxu0 %v607
    %1319 = vmatpush.bf16.msra.mxu0 %v605
    %1320 = vmatmul.bf16.gmra.mxu0 %v1162
    %v1321 = vpop.f32.mrf.mxu0
    %v1322 = vadd.f32 %v1309, %v1321
    %v1323 = vpop.f32.mrf.mxu0
    %1324 = vdwg.mxu0
    %1325 = vmatpush.bf16.msra.mxu0 %v1066
    %1326 = vmatpush.bf16.msra.mxu0 %v1064
    %1327 = vmatpush.bf16.msra.mxu0 %v1062
    %1328 = vmatpush.bf16.msra.mxu0 %v1060
    %1329 = vmatpush.bf16.msra.mxu0 %v1058
    %1330 = vmatpush.bf16.msra.mxu0 %v1056
    %1331 = vmatpush.bf16.msra.mxu0 %v1054
    %1332 = vmatpush.bf16.msra.mxu0 %v1052
    %1333 = vmatmul.bf16.gmra.mxu0 %v1157
    %v1334 = vpop.f32.mrf.mxu0
    %v1335 = vadd.f32 0.0, %v1334
    %v1336 = vpop.f32.mrf.mxu0
    %1337 = vdwg.mxu0
    %1338 = vmatpush.bf16.msra.mxu0 %v1082
    %1339 = vmatpush.bf16.msra.mxu0 %v1080
    %1340 = vmatpush.bf16.msra.mxu0 %v1078
    %1341 = vmatpush.bf16.msra.mxu0 %v1076
    %1342 = vmatpush.bf16.msra.mxu0 %v1074
    %1343 = vmatpush.bf16.msra.mxu0 %v1072
    %1344 = vmatpush.bf16.msra.mxu0 %v1070
    %1345 = vmatpush.bf16.msra.mxu0 %v1068
    %1346 = vmatmul.bf16.gmra.mxu0 %v1158
    %v1347 = vpop.f32.mrf.mxu0
    %v1348 = vadd.f32 %v1335, %v1347
    %v1349 = vpop.f32.mrf.mxu0
    %1350 = vdwg.mxu0
    %1351 = vmatpush.bf16.msra.mxu0 %v1098
    %1352 = vmatpush.bf16.msra.mxu0 %v1096
    %1353 = vmatpush.bf16.msra.mxu0 %v1094
    %1354 = vmatpush.bf16.msra.mxu0 %v1092
    %1355 = vmatpush.bf16.msra.mxu0 %v1090
    %1356 = vmatpush.bf16.msra.mxu0 %v1088
    %1357 = vmatpush.bf16.msra.mxu0 %v1086
    %1358 = vmatpush.bf16.msra.mxu0 %v1084
    %1359 = vmatmul.bf16.gmra.mxu0 %v1159
    %v1360 = vpop.f32.mrf.mxu0
    %v1361 = vadd.f32 %v1348, %v1360
    %v1362 = vpop.f32.mrf.mxu0
    %1363 = vdwg.mxu0
    %1364 = vmatpush.bf16.msra.mxu0 %v1114
    %1365 = vmatpush.bf16.msra.mxu0 %v1112
    %1366 = vmatpush.bf16.msra.mxu0 %v1110
    %1367 = vmatpush.bf16.msra.mxu0 %v1108
    %1368 = vmatpush.bf16.msra.mxu0 %v1106
    %1369 = vmatpush.bf16.msra.mxu0 %v1104
    %1370 = vmatpush.bf16.msra.mxu0 %v1102
    %1371 = vmatpush.bf16.msra.mxu0 %v1100
    %1372 = vmatmul.bf16.gmra.mxu0 %v1160
    %v1373 = vpop.f32.mrf.mxu0
    %v1374 = vadd.f32 %v1361, %v1373
    %v1375 = vpop.f32.mrf.mxu0
    %1376 = vdwg.mxu0
    %1377 = vmatpush.bf16.msra.mxu0 %v1130
    %1378 = vmatpush.bf16.msra.mxu0 %v1128
    %1379 = vmatpush.bf16.msra.mxu0 %v1126
    %1380 = vmatpush.bf16.msra.mxu0 %v1124
    %1381 = vmatpush.bf16.msra.mxu0 %v1122
    %1382 = vmatpush.bf16.msra.mxu0 %v1120
    %1383 = vmatpush.bf16.msra.mxu0 %v1118
    %1384 = vmatpush.bf16.msra.mxu0 %v1116
    %1385 = vmatmul.bf16.gmra.mxu0 %v1161
    %v1386 = vpop.f32.mrf.mxu0
    %v1387 = vadd.f32 %v1374, %v1386
    %v1388 = vpop.f32.mrf.mxu0
    %1389 = vdwg.mxu0
    %1390 = vmatpush.bf16.msra.mxu0 %v1146
    %1391 = vmatpush.bf16.msra.mxu0 %v1144
    %1392 = vmatpush.bf16.msra.mxu0 %v1142
    %1393 = vmatpush.bf16.msra.mxu0 %v1140
    %1394 = vmatpush.bf16.msra.mxu0 %v1138
    %1395 = vmatpush.bf16.msra.mxu0 %v1136
    %1396 = vmatpush.bf16.msra.mxu0 %v1134
    %1397 = vmatpush.bf16.msra.mxu0 %v1132
    %1398 = vmatmul.bf16.gmra.mxu0 %v1162
    %v1399 = vpop.f32.mrf.mxu0
    %v1400 = vadd.f32 %v1387, %v1399
    %v1401 = vpop.f32.mrf.mxu0
    %1402 = vdwg.mxu0
    %1403 = vmatpush.bf16.msra.mxu0 %v1067
    %1404 = vmatpush.bf16.msra.mxu0 %v1065
    %1405 = vmatpush.bf16.msra.mxu0 %v1063
    %1406 = vmatpush.bf16.msra.mxu0 %v1061
    %1407 = vmatpush.bf16.msra.mxu0 %v1059
    %1408 = vmatpush.bf16.msra.mxu0 %v1057
    %1409 = vmatpush.bf16.msra.mxu0 %v1055
    %1410 = vmatpush.bf16.msra.mxu0 %v1053
    %1411 = vmatmul.bf16.gmra.mxu0 %v1157
    %v1412 = vpop.f32.mrf.mxu0
    %v1413 = vadd.f32 0.0, %v1412
    %v1414 = vpop.f32.mrf.mxu0
    %1415 = vdwg.mxu0
    %1416 = vmatpush.bf16.msra.mxu0 %v1083
    %1417 = vmatpush.bf16.msra.mxu0 %v1081
    %1418 = vmatpush.bf16.msra.mxu0 %v1079
    %1419 = vmatpush.bf16.msra.mxu0 %v1077
    %1420 = vmatpush.bf16.msra.mxu0 %v1075
    %1421 = vmatpush.bf16.msra.mxu0 %v1073
    %1422 = vmatpush.bf16.msra.mxu0 %v1071
    %1423 = vmatpush.bf16.msra.mxu0 %v1069
    %1424 = vmatmul.bf16.gmra.mxu0 %v1158
    %v1425 = vpop.f32.mrf.mxu0
    %v1426 = vadd.f32 %v1413, %v1425
    %v1427 = vpop.f32.mrf.mxu0
    %1428 = vdwg.mxu0
    %1429 = vmatpush.bf16.msra.mxu0 %v1099
    %1430 = vmatpush.bf16.msra.mxu0 %v1097
    %1431 = vmatpush.bf16.msra.mxu0 %v1095
    %1432 = vmatpush.bf16.msra.mxu0 %v1093
    %1433 = vmatpush.bf16.msra.mxu0 %v1091
    %1434 = vmatpush.bf16.msra.mxu0 %v1089
    %1435 = vmatpush.bf16.msra.mxu0 %v1087
    %1436 = vmatpush.bf16.msra.mxu0 %v1085
    %1437 = vmatmul.bf16.gmra.mxu0 %v1159
    %v1438 = vpop.f32.mrf.mxu0
    %v1439 = vadd.f32 %v1426, %v1438
    %v1440 = vpop.f32.mrf.mxu0
    %1441 = vdwg.mxu0
    %1442 = vmatpush.bf16.msra.mxu0 %v1115
    %1443 = vmatpush.bf16.msra.mxu0 %v1113
    %1444 = vmatpush.bf16.msra.mxu0 %v1111
    %1445 = vmatpush.bf16.msra.mxu0 %v1109
    %1446 = vmatpush.bf16.msra.mxu0 %v1107
    %1447 = vmatpush.bf16.msra.mxu0 %v1105
    %1448 = vmatpush.bf16.msra.mxu0 %v1103
    %1449 = vmatpush.bf16.msra.mxu0 %v1101
    %1450 = vmatmul.bf16.gmra.mxu0 %v1160
    %v1451 = vpop.f32.mrf.mxu0
    %v1452 = vadd.f32 %v1439, %v1451
    %v1453 = vpop.f32.mrf.mxu0
    %1454 = vdwg.mxu0
    %1455 = vmatpush.bf16.msra.mxu0 %v1131
    %1456 = vmatpush.bf16.msra.mxu0 %v1129
    %1457 = vmatpush.bf16.msra.mxu0 %v1127
    %1458 = vmatpush.bf16.msra.mxu0 %v1125
    %1459 = vmatpush.bf16.msra.mxu0 %v1123
    %1460 = vmatpush.bf16.msra.mxu0 %v1121
    %1461 = vmatpush.bf16.msra.mxu0 %v1119
    %1462 = vmatpush.bf16.msra.mxu0 %v1117
    %1463 = vmatmul.bf16.gmra.mxu0 %v1161
    %v1464 = vpop.f32.mrf.mxu0
    %v1465 = vadd.f32 %v1452, %v1464
    %v1466 = vpop.f32.mrf.mxu0
    %1467 = vdwg.mxu0
    %1468 = vmatpush.bf16.msra.mxu0 %v1147
    %1469 = vmatpush.bf16.msra.mxu0 %v1145
    %1470 = vmatpush.bf16.msra.mxu0 %v1143
    %1471 = vmatpush.bf16.msra.mxu0 %v1141
    %1472 = vmatpush.bf16.msra.mxu0 %v1139
    %1473 = vmatpush.bf16.msra.mxu0 %v1137
    %1474 = vmatpush.bf16.msra.mxu0 %v1135
    %1475 = vmatpush.bf16.msra.mxu0 %v1133
    %1476 = vmatmul.bf16.gmra.mxu0 %v1162
    %v1477 = vpop.f32.mrf.mxu0
    %v1478 = vadd.f32 %v1465, %v1477
    %v1479 = vpop.f32.mrf.mxu0
    %1480 = vdwg.mxu0
    %v1481 = vld [vmem:[#allocation5] sm:$0xff]
    %v1482 = vld [vmem:[#allocation5 + $0x8] sm:$0xff]
    %v1483 = vld [vmem:[#allocation5 + $0x10] sm:$0xff]
    %v1484 = vld [vmem:[#allocation5 + $0x18] sm:$0xff]
    %v1485 = vld [vmem:[#allocation5 + $0x20] sm:$0xff]
    %v1486 = vld [vmem:[#allocation5 + $0x28] sm:$0xff]
    %v1487 = vlaneseq
    %v1488 = vshrl.u32 %v1487, 7
    %vm1489 = vcmp.lt.s32.totalorder %v1488, 2
    %v1490 = vsel %vm1489, %v1244, %v1400
    %v1491 = vsel %vm1489, %v1322, %v1478
    %v1492 = vmul.f32 %v1490, %v1481
    %v1493 = vmul.f32 %v1491, %v1482
    %v1494 = vadd.f32 %v1492, %v1483
    %v1495 = vadd.f32 %v1493, %v1484
    %v1496 = vmax.f32 %v1494, 0.0
    %v1497 = vmax.f32 %v1495, 0.0
    %v1498 = vpack.c.bf16 %v1496, %v1496
    %v1499 = vpack.c.bf16 %v1497, %v1497
    %v1500 = vld [vmem:[%s3] sm:$0xf]
    %v1501 = vld [vmem:[%s3 + $0x4] sm:$0xf]
    %v1502 = vld [vmem:[%s3 + $0x8] sm:$0xf]
    %v1503 = vld [vmem:[%s3 + $0xc] sm:$0xf]
    %v1504 = vld [vmem:[%s3 + $0x10] sm:$0xf]
    %v1505 = vld [vmem:[%s3 + $0x14] sm:$0xf]
    %v1506 = vld [vmem:[%s3 + $0x18] sm:$0xf]
    %v1507 = vld [vmem:[%s3 + $0x1c] sm:$0xf]
    %v1508 = vld [vmem:[%s3 + $0x20] sm:$0xf]
    %v1509 = vld [vmem:[%s3 + $0x24] sm:$0xf]
    %v1510 = vld [vmem:[%s3 + $0x28] sm:$0xf]
    %v1511 = vld [vmem:[%s3 + $0x2c] sm:$0xf]
    %v1512 = vld [vmem:[%s3 + $0x30] sm:$0xf]
    %v1513 = vld [vmem:[%s3 + $0x34] sm:$0xf]
    %v1514 = vld [vmem:[%s3 + $0x38] sm:$0xf]
    %v1515 = vld [vmem:[%s3 + $0x3c] sm:$0xf]
    %v1516 = vld [vmem:[%s3 + $0x40] sm:$0xf]
    %v1517 = vld [vmem:[%s3 + $0x44] sm:$0xf]
    %v1518 = vld [vmem:[%s3 + $0x48] sm:$0xf]
    %v1519 = vld [vmem:[%s3 + $0x4c] sm:$0xf]
    %v1520 = vld [vmem:[%s3 + $0x50] sm:$0xf]
    %v1521 = vld [vmem:[%s3 + $0x54] sm:$0xf]
    %v1522 = vld [vmem:[%s3 + $0x58] sm:$0xf]
    %v1523 = vld [vmem:[%s3 + $0x5c] sm:$0xf]
    %v1524 = vld [vmem:[%s3 + $0x60] sm:$0xf]
    %v1525 = vld [vmem:[%s3 + $0x64] sm:$0xf]
    %v1526 = vld [vmem:[%s3 + $0x68] sm:$0xf]
    %v1527 = vld [vmem:[%s3 + $0x6c] sm:$0xf]
    %v1528 = vld [vmem:[%s3 + $0x70] sm:$0xf]
    %v1529 = vld [vmem:[%s3 + $0x74] sm:$0xf]
    %v1530 = vld [vmem:[%s3 + $0x78] sm:$0xf]
    %v1531 = vld [vmem:[%s3 + $0x7c] sm:$0xf]
    %v1564 = vunpack.c.l.b16 %v1500
    %v1565 = vunpack.c.l.b16 %v1501
    %v1566 = vunpack.c.l.b16 %v1502
    %v1567 = vunpack.c.l.b16 %v1503
    %v1568 = vunpack.c.l.b16 %v1504
    %v1569 = vunpack.c.l.b16 %v1505
    %v1570 = vunpack.c.l.b16 %v1506
    %v1571 = vunpack.c.l.b16 %v1507
    %v1572 = vunpack.c.l.b16 %v1508
    %v1573 = vunpack.c.l.b16 %v1509
    %v1574 = vunpack.c.l.b16 %v1510
    %v1575 = vunpack.c.l.b16 %v1511
    %v1576 = vunpack.c.l.b16 %v1512
    %v1577 = vunpack.c.l.b16 %v1513
    %v1578 = vunpack.c.l.b16 %v1514
    %v1579 = vunpack.c.l.b16 %v1515
    %v1580 = vunpack.c.l.b16 %v1516
    %v1581 = vunpack.c.l.b16 %v1517
    %v1582 = vunpack.c.l.b16 %v1518
    %v1583 = vunpack.c.l.b16 %v1519
    %v1584 = vunpack.c.l.b16 %v1520
    %v1585 = vunpack.c.l.b16 %v1521
    %v1586 = vunpack.c.l.b16 %v1522
    %v1587 = vunpack.c.l.b16 %v1523
    %v1588 = vunpack.c.l.b16 %v1524
    %v1589 = vunpack.c.l.b16 %v1525
    %v1590 = vunpack.c.l.b16 %v1526
    %v1591 = vunpack.c.l.b16 %v1527
    %v1592 = vunpack.c.l.b16 %v1528
    %v1593 = vunpack.c.l.b16 %v1529
    %v1594 = vunpack.c.l.b16 %v1530
    %v1595 = vunpack.c.l.b16 %v1531
    %v1596 = vpack.c.b16 %v1565, %v1564
    %v1597 = vpack.c.b16 %v1567, %v1566
    %v1598 = vpack.c.b16 %v1569, %v1568
    %v1599 = vpack.c.b16 %v1571, %v1570
    %v1600 = vpack.c.b16 %v1573, %v1572
    %v1601 = vpack.c.b16 %v1575, %v1574
    %v1602 = vpack.c.b16 %v1577, %v1576
    %v1603 = vpack.c.b16 %v1579, %v1578
    %v1604 = vpack.c.b16 %v1581, %v1580
    %v1605 = vpack.c.b16 %v1583, %v1582
    %v1606 = vpack.c.b16 %v1585, %v1584
    %v1607 = vpack.c.b16 %v1587, %v1586
    %v1608 = vpack.c.b16 %v1589, %v1588
    %v1609 = vpack.c.b16 %v1591, %v1590
    %v1610 = vpack.c.b16 %v1593, %v1592
    %v1611 = vpack.c.b16 %v1595, %v1594
    %1628 = vmatpush.bf16.msra.mxu0 %v1603
    %1629 = vmatpush.bf16.msra.mxu0 %v1602
    %1630 = vmatpush.bf16.msra.mxu0 %v1601
    %1631 = vmatpush.bf16.msra.mxu0 %v1600
    %1632 = vmatpush.bf16.msra.mxu0 %v1599
    %1633 = vmatpush.bf16.msra.mxu0 %v1598
    %1634 = vmatpush.bf16.msra.mxu0 %v1597
    %1635 = vmatpush.bf16.msra.mxu0 %v1596
    %1636 = vmatmul.bf16.gmra.mxu0 %v1498
    %v1637 = vpop.f32.mrf.mxu0
    %v1638 = vadd.f32 0.0, %v1637
    %v1639 = vpop.f32.mrf.mxu0
    %1640 = vdwg.mxu0
    %1641 = vmatpush.bf16.msra.mxu0 %v1611
    %1642 = vmatpush.bf16.msra.mxu0 %v1610
    %1643 = vmatpush.bf16.msra.mxu0 %v1609
    %1644 = vmatpush.bf16.msra.mxu0 %v1608
    %1645 = vmatpush.bf16.msra.mxu0 %v1607
    %1646 = vmatpush.bf16.msra.mxu0 %v1606
    %1647 = vmatpush.bf16.msra.mxu0 %v1605
    %1648 = vmatpush.bf16.msra.mxu0 %v1604
    %1649 = vmatmul.bf16.gmra.mxu0 %v1499
    %v1650 = vpop.f32.mrf.mxu0
    %v1651 = vadd.f32 %v1638, %v1650
    %v1652 = vpop.f32.mrf.mxu0
    %1653 = vdwg.mxu0
    %v1654 = vmax.f32 %v1651, 0.0
    %v1655 = vpack.c.bf16 %v1654, %v1654
    %v1656 = vld [vmem:[#allocation7] sm:$0xff]
    %v1657 = vld [vmem:[#allocation7 + $0x8] sm:$0xff]
    %v1658 = vld [vmem:[#allocation7 + $0x10] sm:$0xff]
    %v1659 = vld [vmem:[#allocation7 + $0x18] sm:$0xff]
    %v1660 = vld [vmem:[#allocation7 + $0x20] sm:$0xff]
    %v1661 = vld [vmem:[#allocation7 + $0x28] sm:$0xff]
    %v1662 = vld [vmem:[#allocation7 + $0x30] sm:$0xff]
    %v1663 = vld [vmem:[#allocation7 + $0x38] sm:$0xff]
    %v1672 = vunpack.c.l.b16 %v1656
    %v1673 = vunpack.c.h.b16 %v1656
    %v1674 = vunpack.c.l.b16 %v1657
    %v1675 = vunpack.c.h.b16 %v1657
    %v1676 = vunpack.c.l.b16 %v1658
    %v1677 = vunpack.c.h.b16 %v1658
    %v1678 = vunpack.c.l.b16 %v1659
    %v1679 = vunpack.c.h.b16 %v1659
    %v1680 = vunpack.c.l.b16 %v1660
    %v1681 = vunpack.c.h.b16 %v1660
    %v1682 = vunpack.c.l.b16 %v1661
    %v1683 = vunpack.c.h.b16 %v1661
    %v1684 = vunpack.c.l.b16 %v1662
    %v1685 = vunpack.c.h.b16 %v1662
    %v1686 = vunpack.c.l.b16 %v1663
    %v1687 = vunpack.c.h.b16 %v1663
    %v1688 = vpack.c.b16 %v1676, %v1672
    %v1689 = vpack.c.b16 %v1677, %v1673
    %v1690 = vpack.c.b16 %v1678, %v1674
    %v1691 = vpack.c.b16 %v1679, %v1675
    %v1692 = vpack.c.b16 %v1684, %v1680
    %v1693 = vpack.c.b16 %v1685, %v1681
    %v1694 = vpack.c.b16 %v1686, %v1682
    %v1695 = vpack.c.b16 %v1687, %v1683
    %vm1704 = vcmask 261120
    %v1706 = vsel %vm1704, %v1655, 0
    %1708 = vmatpush.bf16.msra.mxu0 0
    %1709 = vmatpush.bf16.msra.mxu0 0
    %1710 = vmatpush.bf16.msra.mxu0 0
    %1711 = vmatpush.bf16.msra.mxu0 0
    %1712 = vmatpush.bf16.msra.mxu0 0
    %1713 = vmatpush.bf16.msra.mxu0 0
    %1714 = vmatpush.bf16.msra.mxu0 %v1692
    %1715 = vmatpush.bf16.msra.mxu0 %v1688
    %1716 = vmatmul.bf16.gmra.mxu0 %v1706
    %v1717 = vpop.f32.mrf.mxu0
    %v1718 = vadd.f32 0.0, %v1717
    %v1719 = vpop.f32.mrf.mxu0
    %1720 = vdwg.mxu0
    %1721 = vmatpush.bf16.msra.mxu0 0
    %1722 = vmatpush.bf16.msra.mxu0 0
    %1723 = vmatpush.bf16.msra.mxu0 0
    %1724 = vmatpush.bf16.msra.mxu0 0
    %1725 = vmatpush.bf16.msra.mxu0 0
    %1726 = vmatpush.bf16.msra.mxu0 0
    %1727 = vmatpush.bf16.msra.mxu0 %v1693
    %1728 = vmatpush.bf16.msra.mxu0 %v1689
    %1729 = vmatmul.bf16.gmra.mxu0 %v1706
    %v1730 = vpop.f32.mrf.mxu0
    %v1731 = vadd.f32 0.0, %v1730
    %v1732 = vpop.f32.mrf.mxu0
    %1733 = vdwg.mxu0
    %1734 = vmatpush.bf16.msra.mxu0 0
    %1735 = vmatpush.bf16.msra.mxu0 0
    %1736 = vmatpush.bf16.msra.mxu0 0
    %1737 = vmatpush.bf16.msra.mxu0 0
    %1738 = vmatpush.bf16.msra.mxu0 0
    %1739 = vmatpush.bf16.msra.mxu0 0
    %1740 = vmatpush.bf16.msra.mxu0 %v1694
    %1741 = vmatpush.bf16.msra.mxu0 %v1690
    %1742 = vmatmul.bf16.gmra.mxu0 %v1706
    %v1743 = vpop.f32.mrf.mxu0
    %v1744 = vadd.f32 0.0, %v1743
    %v1745 = vpop.f32.mrf.mxu0
    %1746 = vdwg.mxu0
    %1747 = vmatpush.bf16.msra.mxu0 0
    %1748 = vmatpush.bf16.msra.mxu0 0
    %1749 = vmatpush.bf16.msra.mxu0 0
    %1750 = vmatpush.bf16.msra.mxu0 0
    %1751 = vmatpush.bf16.msra.mxu0 0
    %1752 = vmatpush.bf16.msra.mxu0 0
    %1753 = vmatpush.bf16.msra.mxu0 %v1695
    %1754 = vmatpush.bf16.msra.mxu0 %v1691
    %1755 = vmatmul.bf16.gmra.mxu0 %v1706
    %v1756 = vpop.f32.mrf.mxu0
    %v1757 = vadd.f32 0.0, %v1756
    %v1758 = vpop.f32.mrf.mxu0
    %1759 = vdwg.mxu0
    %v1760 = vsel %vm1489, %v1718, %v1744
    %v1761 = vsel %vm1489, %v1731, %v1757
    %v1762 = vxor.u32 %v1760, 2147483648
    %v1763 = vxor.u32 %v1761, 2147483648
    %v1764 = vmul.f32 %v1762, 1.442695
    %v1765 = vpow.pop %v1764
    %v1766 = vmul.f32 %v1763, 1.442695
    %v1767 = vpow.pop %v1766
    %v1768 = vadd.f32 %v1765, 1.0
    %v1769 = vadd.f32 %v1767, 1.0
    %v1770 = vrcp.pop %v1768
    %v1771 = vmul.f32 %v1768, %v1770
    %v1772 = vsub.f32 1.0, %v1771
    %v1773 = vmul.f32 %v1770, %v1772
    %v1774 = vadd.f32 %v1770, %v1773
    %vm1775 = vweird.f32 %v1768
    %vm1776 = vweird.f32 %v1770
    %vm1777 = vmor %vm1775, %vm1776
    %v1778 = vsel %vm1777, %v1770, %v1774
    %v1779 = vand.u32 2147483647, %v1768
    %vm1780 = vcmp.eq.f32.partialorder %v1779, 8.507059e+37
    %v1781 = vand.u32 %v1768, 2147483648
    %v1782 = vor.u32 1.1754944e-38, %v1781
    %v1783 = vsel %vm1780, %v1782, %v1778
    %v1784 = vmul.f32 1.0, %v1783
    %v1785 = vrcp.pop %v1769
    %v1786 = vmul.f32 %v1769, %v1785
    %v1787 = vsub.f32 1.0, %v1786
    %v1788 = vmul.f32 %v1785, %v1787
    %v1789 = vadd.f32 %v1785, %v1788
    %vm1790 = vweird.f32 %v1769
    %vm1791 = vweird.f32 %v1785
    %vm1792 = vmor %vm1790, %vm1791
    %v1793 = vsel %vm1792, %v1785, %v1789
    %v1794 = vand.u32 2147483647, %v1769
    %vm1795 = vcmp.eq.f32.partialorder %v1794, 8.507059e+37
    %v1796 = vand.u32 %v1769, 2147483648
    %v1797 = vor.u32 1.1754944e-38, %v1796
    %v1798 = vsel %vm1795, %v1797, %v1793
    %v1799 = vmul.f32 1.0, %v1798
    %v1800 = vlaneseq
    %v1801 = vand.u32 %v1800, 127
    %v1802 = vadd.s32 %v1488, 2
    %v1803 = vsub.s32 %v1488, 2
    %v1804 = vsel %vm1489, %v1802, %v1803
    %vm1805 = vcmp.eq.s32.totalorder %v1801, %v1804
    %v1806 = vsel %vm1805, 1, 0
    %v1807 = vcvt.s32.f32 %v1806
    %vm1808 = vcmask 64512
    %v1810 = vsel %vm1808, %v1807, 0
    %1812 = vmatpush.msra.mxu0 0.0
    %1813 = vmatpush.msra.mxu0 0.0
    %1814 = vmatpush.msra.mxu0 0.0
    %1815 = vmatpush.msra.mxu0 0.0
    %1816 = vmatpush.msra.mxu0 0.0
    %1817 = vmatpush.msra.mxu0 0.0
    %1818 = vmatpush.msra.mxu0 0.0
    %1819 = vmatpush.msra.mxu0 0.0
    %1820 = vmatpush.msra.mxu0 0.0
    %1821 = vmatpush.msra.mxu0 0.0
    %1822 = vmatpush.msra.mxu0 0.0
    %1823 = vmatpush.msra.mxu0 0.0
    %1824 = vmatpush.msra.mxu0 0.0
    %1825 = vmatpush.msra.mxu0 0.0
    %1826 = vmatpush.msra.mxu0 0.0
    %1827 = vmatpush.msra.mxu0 %v1496
    %1828 = vmatmul.f32.gmra.mxu0 %v1810
    %v1829 = vpop.f32.mrf.mxu0
    %v1830 = vadd.f32 0.0, %v1829
    %1831 = vdwg.mxu0
    %1832 = vmatpush.msra.mxu0 0.0
    %1833 = vmatpush.msra.mxu0 0.0
    %1834 = vmatpush.msra.mxu0 0.0
    %1835 = vmatpush.msra.mxu0 0.0
    %1836 = vmatpush.msra.mxu0 0.0
    %1837 = vmatpush.msra.mxu0 0.0
    %1838 = vmatpush.msra.mxu0 0.0
    %1839 = vmatpush.msra.mxu0 0.0
    %1840 = vmatpush.msra.mxu0 0.0
    %1841 = vmatpush.msra.mxu0 0.0
    %1842 = vmatpush.msra.mxu0 0.0
    %1843 = vmatpush.msra.mxu0 0.0
    %1844 = vmatpush.msra.mxu0 0.0
    %1845 = vmatpush.msra.mxu0 0.0
    %1846 = vmatpush.msra.mxu0 0.0
    %1847 = vmatpush.msra.mxu0 %v1497
    %1848 = vmatmul.f32.gmra.mxu0 %v1810
    %v1849 = vpop.f32.mrf.mxu0
    %v1850 = vadd.f32 0.0, %v1849
    %1851 = vdwg.mxu0
    %1852 = vmatpush.msra.mxu0 0.0
    %1853 = vmatpush.msra.mxu0 0.0
    %1854 = vmatpush.msra.mxu0 0.0
    %1855 = vmatpush.msra.mxu0 0.0
    %1856 = vmatpush.msra.mxu0 0.0
    %1857 = vmatpush.msra.mxu0 0.0
    %1858 = vmatpush.msra.mxu0 0.0
    %1859 = vmatpush.msra.mxu0 0.0
    %1860 = vmatpush.msra.mxu0 0.0
    %1861 = vmatpush.msra.mxu0 0.0
    %1862 = vmatpush.msra.mxu0 0.0
    %1863 = vmatpush.msra.mxu0 0.0
    %1864 = vmatpush.msra.mxu0 0.0
    %1865 = vmatpush.msra.mxu0 0.0
    %1866 = vmatpush.msra.mxu0 0.0
    %1867 = vmatpush.msra.mxu0 %v1784
    %1868 = vmatmul.f32.gmra.mxu0 %v1810
    %v1869 = vpop.f32.mrf.mxu0
    %v1870 = vadd.f32 0.0, %v1869
    %1871 = vdwg.mxu0
    %1872 = vmatpush.msra.mxu0 0.0
    %1873 = vmatpush.msra.mxu0 0.0
    %1874 = vmatpush.msra.mxu0 0.0
    %1875 = vmatpush.msra.mxu0 0.0
    %1876 = vmatpush.msra.mxu0 0.0
    %1877 = vmatpush.msra.mxu0 0.0
    %1878 = vmatpush.msra.mxu0 0.0
    %1879 = vmatpush.msra.mxu0 0.0
    %1880 = vmatpush.msra.mxu0 0.0
    %1881 = vmatpush.msra.mxu0 0.0
    %1882 = vmatpush.msra.mxu0 0.0
    %1883 = vmatpush.msra.mxu0 0.0
    %1884 = vmatpush.msra.mxu0 0.0
    %1885 = vmatpush.msra.mxu0 0.0
    %1886 = vmatpush.msra.mxu0 0.0
    %1887 = vmatpush.msra.mxu0 %v1799
    %1888 = vmatmul.f32.gmra.mxu0 %v1810
    %v1889 = vpop.f32.mrf.mxu0
    %v1890 = vadd.f32 0.0, %v1889
    %1891 = vdwg.mxu0
    %v1892 = vmul.f32 %v1496, %v1870
    %v1893 = vmul.f32 %v1497, %v1890
    %v1894 = vmul.f32 %v1830, %v1784
    %v1895 = vmul.f32 %v1850, %v1799
    %v1896 = vadd.f32 %v1892, %v1894
    %v1897 = vadd.f32 %v1893, %v1895
    %v1898 = vpack.c.bf16 %v1896, %v1896
    %v1899 = vpack.c.bf16 %v1897, %v1897
    %v1900 = vld [vmem:[%s5] sm:$0xf]
    %v1901 = vld [vmem:[%s5 + $0x4] sm:$0xf]
    %v1902 = vld [vmem:[%s5 + $0x8] sm:$0xf]
    %v1903 = vld [vmem:[%s5 + $0xc] sm:$0xf]
    %v1904 = vld [vmem:[%s5 + $0x10] sm:$0xf]
    %v1905 = vld [vmem:[%s5 + $0x14] sm:$0xf]
    %v1906 = vld [vmem:[%s5 + $0x18] sm:$0xf]
    %v1907 = vld [vmem:[%s5 + $0x1c] sm:$0xf]
    %v1908 = vld [vmem:[%s5 + $0x20] sm:$0xf]
    %v1909 = vld [vmem:[%s5 + $0x24] sm:$0xf]
    %v1910 = vld [vmem:[%s5 + $0x28] sm:$0xf]
    %v1911 = vld [vmem:[%s5 + $0x2c] sm:$0xf]
    %v1912 = vld [vmem:[%s5 + $0x30] sm:$0xf]
    %v1913 = vld [vmem:[%s5 + $0x34] sm:$0xf]
    %v1914 = vld [vmem:[%s5 + $0x38] sm:$0xf]
    %v1915 = vld [vmem:[%s5 + $0x3c] sm:$0xf]
    %v1916 = vld [vmem:[%s5 + $0x40] sm:$0xf]
    %v1917 = vld [vmem:[%s5 + $0x44] sm:$0xf]
    %v1918 = vld [vmem:[%s5 + $0x48] sm:$0xf]
    %v1919 = vld [vmem:[%s5 + $0x4c] sm:$0xf]
    %v1920 = vld [vmem:[%s5 + $0x50] sm:$0xf]
    %v1921 = vld [vmem:[%s5 + $0x54] sm:$0xf]
    %v1922 = vld [vmem:[%s5 + $0x58] sm:$0xf]
    %v1923 = vld [vmem:[%s5 + $0x5c] sm:$0xf]
    %v1924 = vld [vmem:[%s5 + $0x60] sm:$0xf]
    %v1925 = vld [vmem:[%s5 + $0x64] sm:$0xf]
    %v1926 = vld [vmem:[%s5 + $0x68] sm:$0xf]
    %v1927 = vld [vmem:[%s5 + $0x6c] sm:$0xf]
    %v1928 = vld [vmem:[%s5 + $0x70] sm:$0xf]
    %v1929 = vld [vmem:[%s5 + $0x74] sm:$0xf]
    %v1930 = vld [vmem:[%s5 + $0x78] sm:$0xf]
    %v1931 = vld [vmem:[%s5 + $0x7c] sm:$0xf]
    %v1964 = vunpack.c.l.b16 %v1900
    %v1965 = vunpack.c.l.b16 %v1901
    %v1966 = vunpack.c.l.b16 %v1902
    %v1967 = vunpack.c.l.b16 %v1903
    %v1968 = vunpack.c.l.b16 %v1904
    %v1969 = vunpack.c.l.b16 %v1905
    %v1970 = vunpack.c.l.b16 %v1906
    %v1971 = vunpack.c.l.b16 %v1907
    %v1972 = vunpack.c.l.b16 %v1908
    %v1973 = vunpack.c.l.b16 %v1909
    %v1974 = vunpack.c.l.b16 %v1910
    %v1975 = vunpack.c.l.b16 %v1911
    %v1976 = vunpack.c.l.b16 %v1912
    %v1977 = vunpack.c.l.b16 %v1913
    %v1978 = vunpack.c.l.b16 %v1914
    %v1979 = vunpack.c.l.b16 %v1915
    %v1980 = vunpack.c.l.b16 %v1916
    %v1981 = vunpack.c.l.b16 %v1917
    %v1982 = vunpack.c.l.b16 %v1918
    %v1983 = vunpack.c.l.b16 %v1919
    %v1984 = vunpack.c.l.b16 %v1920
    %v1985 = vunpack.c.l.b16 %v1921
    %v1986 = vunpack.c.l.b16 %v1922
    %v1987 = vunpack.c.l.b16 %v1923
    %v1988 = vunpack.c.l.b16 %v1924
    %v1989 = vunpack.c.l.b16 %v1925
    %v1990 = vunpack.c.l.b16 %v1926
    %v1991 = vunpack.c.l.b16 %v1927
    %v1992 = vunpack.c.l.b16 %v1928
    %v1993 = vunpack.c.l.b16 %v1929
    %v1994 = vunpack.c.l.b16 %v1930
    %v1995 = vunpack.c.l.b16 %v1931
    %v1996 = vpack.c.b16 %v1965, %v1964
    %v1997 = vpack.c.b16 %v1967, %v1966
    %v1998 = vpack.c.b16 %v1969, %v1968
    %v1999 = vpack.c.b16 %v1971, %v1970
    %v2000 = vpack.c.b16 %v1973, %v1972
    %v2001 = vpack.c.b16 %v1975, %v1974
    %v2002 = vpack.c.b16 %v1977, %v1976
    %v2003 = vpack.c.b16 %v1979, %v1978
    %v2004 = vpack.c.b16 %v1981, %v1980
    %v2005 = vpack.c.b16 %v1983, %v1982
    %v2006 = vpack.c.b16 %v1985, %v1984
    %v2007 = vpack.c.b16 %v1987, %v1986
    %v2008 = vpack.c.b16 %v1989, %v1988
    %v2009 = vpack.c.b16 %v1991, %v1990
    %v2010 = vpack.c.b16 %v1993, %v1992
    %v2011 = vpack.c.b16 %v1995, %v1994
    %2028 = vmatpush.bf16.msra.mxu0 %v2003
    %2029 = vmatpush.bf16.msra.mxu0 %v2002
    %2030 = vmatpush.bf16.msra.mxu0 %v2001
    %2031 = vmatpush.bf16.msra.mxu0 %v2000
    %2032 = vmatpush.bf16.msra.mxu0 %v1999
    %2033 = vmatpush.bf16.msra.mxu0 %v1998
    %2034 = vmatpush.bf16.msra.mxu0 %v1997
    %2035 = vmatpush.bf16.msra.mxu0 %v1996
    %2036 = vmatmul.bf16.gmra.mxu0 %v1898
    %v2037 = vpop.f32.mrf.mxu0
    %v2038 = vadd.f32 %v1485, %v2037
    %v2039 = vpop.f32.mrf.mxu0
    %2040 = vdwg.mxu0
    %2041 = vmatpush.bf16.msra.mxu0 %v2011
    %2042 = vmatpush.bf16.msra.mxu0 %v2010
    %2043 = vmatpush.bf16.msra.mxu0 %v2009
    %2044 = vmatpush.bf16.msra.mxu0 %v2008
    %2045 = vmatpush.bf16.msra.mxu0 %v2007
    %2046 = vmatpush.bf16.msra.mxu0 %v2006
    %2047 = vmatpush.bf16.msra.mxu0 %v2005
    %2048 = vmatpush.bf16.msra.mxu0 %v2004
    %2049 = vmatmul.bf16.gmra.mxu0 %v1899
    %v2050 = vpop.f32.mrf.mxu0
    %v2051 = vadd.f32 %v2038, %v2050
    %v2052 = vpop.f32.mrf.mxu0
    %2053 = vdwg.mxu0
    %v2054 = vxor.u32 %v2051, 2147483648
    %v2055 = vmul.f32 %v2054, 1.442695
    %v2056 = vpow.pop %v2055
    %v2057 = vadd.f32 %v2056, 1.0
    %v2058 = vrcp.pop %v2057
    %v2059 = vmul.f32 %v2057, %v2058
    %v2060 = vsub.f32 1.0, %v2059
    %v2061 = vmul.f32 %v2058, %v2060
    %v2062 = vadd.f32 %v2058, %v2061
    %vm2063 = vweird.f32 %v2057
    %vm2064 = vweird.f32 %v2058
    %vm2065 = vmor %vm2063, %vm2064
    %v2066 = vsel %vm2065, %v2058, %v2062
    %v2067 = vand.u32 2147483647, %v2057
    %vm2068 = vcmp.eq.f32.partialorder %v2067, 8.507059e+37
    %v2069 = vand.u32 %v2057, 2147483648
    %v2070 = vor.u32 1.1754944e-38, %v2069
    %v2071 = vsel %vm2068, %v2070, %v2066
    %v2072 = vmul.f32 1.0, %v2071
    %v2073 = vmul.f32 %v2051, %v2072
    %v2074 = vpack.c.bf16 %v2073, %v2073
    %v2075 = vld [vmem:[#allocation8] sm:$0xf]
    %v2076 = vld [vmem:[#allocation8 + $0x4] sm:$0xf]
    %v2077 = vld [vmem:[#allocation8 + $0x8] sm:$0xf]
    %v2078 = vld [vmem:[#allocation8 + $0xc] sm:$0xf]
    %v2079 = vld [vmem:[#allocation8 + $0x10] sm:$0xf]
    %v2080 = vld [vmem:[#allocation8 + $0x14] sm:$0xf]
    %v2081 = vld [vmem:[#allocation8 + $0x18] sm:$0xf]
    %v2082 = vld [vmem:[#allocation8 + $0x1c] sm:$0xf]
    %v2083 = vld [vmem:[#allocation8 + $0x20] sm:$0xf]
    %v2084 = vld [vmem:[#allocation8 + $0x24] sm:$0xf]
    %v2085 = vld [vmem:[#allocation8 + $0x28] sm:$0xf]
    %v2086 = vld [vmem:[#allocation8 + $0x2c] sm:$0xf]
    %v2087 = vld [vmem:[#allocation8 + $0x30] sm:$0xf]
    %v2088 = vld [vmem:[#allocation8 + $0x34] sm:$0xf]
    %v2089 = vld [vmem:[#allocation8 + $0x38] sm:$0xf]
    %v2090 = vld [vmem:[#allocation8 + $0x3c] sm:$0xf]
    %v2107 = vunpack.c.l.b16 %v2075
    %v2108 = vunpack.c.l.b16 %v2076
    %v2109 = vunpack.c.l.b16 %v2077
    %v2110 = vunpack.c.l.b16 %v2078
    %v2111 = vunpack.c.l.b16 %v2079
    %v2112 = vunpack.c.l.b16 %v2080
    %v2113 = vunpack.c.l.b16 %v2081
    %v2114 = vunpack.c.l.b16 %v2082
    %v2115 = vunpack.c.l.b16 %v2083
    %v2116 = vunpack.c.l.b16 %v2084
    %v2117 = vunpack.c.l.b16 %v2085
    %v2118 = vunpack.c.l.b16 %v2086
    %v2119 = vunpack.c.l.b16 %v2087
    %v2120 = vunpack.c.l.b16 %v2088
    %v2121 = vunpack.c.l.b16 %v2089
    %v2122 = vunpack.c.l.b16 %v2090
    %v2123 = vpack.c.b16 %v2108, %v2107
    %v2124 = vpack.c.b16 %v2110, %v2109
    %v2125 = vpack.c.b16 %v2112, %v2111
    %v2126 = vpack.c.b16 %v2114, %v2113
    %v2127 = vpack.c.b16 %v2116, %v2115
    %v2128 = vpack.c.b16 %v2118, %v2117
    %v2129 = vpack.c.b16 %v2120, %v2119
    %v2130 = vpack.c.b16 %v2122, %v2121
    %2139 = vmatpush.bf16.msra.mxu0 %v2130
    %2140 = vmatpush.bf16.msra.mxu0 %v2129
    %2141 = vmatpush.bf16.msra.mxu0 %v2128
    %2142 = vmatpush.bf16.msra.mxu0 %v2127
    %2143 = vmatpush.bf16.msra.mxu0 %v2126
    %2144 = vmatpush.bf16.msra.mxu0 %v2125
    %2145 = vmatpush.bf16.msra.mxu0 %v2124
    %2146 = vmatpush.bf16.msra.mxu0 %v2123
    %2147 = vmatmul.bf16.gmra.mxu0 %v2074
    %v2148 = vpop.f32.mrf.mxu0
    %v2149 = vadd.f32 %v1486, %v2148
    %v2150 = vpop.f32.mrf.mxu0
    %2151 = vdwg.mxu0
    %2152 = vst [vmem:[#allocation10] sm:$0xff] %v2149
    // Predicated region
    $region46: #{tpu_custom_call.1} parent=1 // pred_check
      _
    $region47: #{tpu_custom_call.1} parent=1 // pred_check_branch
      %2154 = sbr.rel (0) target = $region49
    $region48: #{tpu_custom_call.1} parent=1 // pred_region
      %2156 = vsyncadd [#allocation4], 0
      %s2158 = sshll.u32 [#allocation10], 4
      %s2159 = int_to_ptr.vmem [resolvable:$true] %s2158
      %s2160 = sshll.u32 %s7, 4
      %s2161 = int_to_ptr.hbm [resolvable:$true] %s2160
      %2163 = dma.vmem_to_hbm [thread:$0]  %s2159, 128, %s2161, [#allocation4]
    $region49: #{tpu_custom_call.1} parent=1 // pred_fallthru
      _
    // Predicated region
    $region50: #{tpu_custom_call.1} parent=1 // pred_check
      _
    $region51: #{tpu_custom_call.1} parent=1 // pred_check_branch
      %2165 = sbr.rel (0) target = $region53
    $region52: #{tpu_custom_call.1} parent=1 // pred_region
      %2167 = dma.done [#allocation4], 128
    $region53: #{tpu_custom_call.1} parent=1 // pred_fallthru
      _
    %2168 = vsyncpa [#allocation3], 1
    %2169 = vsyncpa [#allocation6], 1
    %2170 = vsyncpa [#allocation9], 1
    %2171 = vsyncpa [#allocation4], 1

</llo_original>
